<compile_context>
chip_gen: v5e
topology: v5e:2x2
jax: 0.10.0
libtpu: 0.0.40
codegen_flags: <defaults>
</compile_context>

<pallas_src>
import math

import jax
import jax.numpy as jnp
from jax import lax
from jax.experimental import pallas as pl
from jax.experimental.pallas import tpu as pltpu

# ----------------------------- config ---------------------------------------
BATCH = 2
SEQ = 8
HIDDEN = 32
NUM_HEADS = 2
HEAD_SIZE = HIDDEN // NUM_HEADS
INNER = 4 * HIDDEN
C_PARAM = 5                      # config['c']
C_KEEP = C_PARAM // 2 + 1        # number of low frequencies kept
ALPHA = 0.7                      # config['alpha']
LN_EPS = 1e-12
MASK_VAL = -10000.0              # additive attention-mask value

# bf16 MXU operands (f32 accumulate) per the review; elementwise math stays
# f32 everywhere, so this is fine on v5e as well.
MXU_DTYPE = jnp.bfloat16


# --------------------------- shared math helpers ------------------------------
def _layernorm(x, w, b, eps=LN_EPS):
    # TF-style layernorm (eps inside the sqrt), biased variance, last dim.
    u = jnp.mean(x, axis=-1, keepdims=True)
    d = x - u
    s = jnp.mean(d * d, axis=-1, keepdims=True)
    return w * (d / jnp.sqrt(s + eps)) + b


def _gelu_erf(x):
    # exact (erf-based) gelu, matching the PyTorch reference
    # (tanh/exp approximation would move work to the EUP on v5e but would no
    # longer bit-match the reference, so it is not used here).
    return x * 0.5 * (1.0 + lax.erf(x / math.sqrt(2.0)))


# ------------------------------ kernel ---------------------------------------
def bsarec_block_kernel(
    x_ref, mask_ref, lp_ref, sqrt_beta_ref,
    ln1_w_ref, ln1_b_ref,
    wqkv_ref, bqkv_ref,
    wd_ref, bd_ref, ln2_w_ref, ln2_b_ref,
    w1_ref, b1_ref, w2_ref, b2_ref, ln3_w_ref, ln3_b_ref,
    out_ref,
):
    # One grid step == one batch element.
    x = x_ref[0]                      # (S, H) f32
    mask = mask_ref[...]              # (S, S) additive causal mask
    lp = lp_ref[...]                  # (S, S) real low-pass filter matrix

    # ---------------- FrequencyLayer (dsp) ----------------
    low = jnp.dot(lp, x, preferred_element_type=jnp.float32)
    sb = sqrt_beta_ref[...]
    beta2 = sb * sb                                   # computed once
    seq_emb_fft = low + beta2 * (x - low)
    dsp = _layernorm(seq_emb_fft + x, ln1_w_ref[...], ln1_b_ref[...])

    # ---------------- MultiHeadAttention (gsp) ----------------
    # Fused QKV: one MXU push, bf16 operands, f32 accumulation.
    qkv = (jnp.dot(x.astype(MXU_DTYPE), wqkv_ref[...],
                   preferred_element_type=jnp.float32)
           + bqkv_ref[...])                           # (S, 3H) f32
    q = qkv[:, 0 * HIDDEN:1 * HIDDEN]
    k = qkv[:, 1 * HIDDEN:2 * HIDDEN]
    v = qkv[:, 2 * HIDDEN:3 * HIDDEN]

    inv_sqrt_hd = 1.0 / math.sqrt(HEAD_SIZE)
    lane = lax.broadcasted_iota(jnp.int32, (1, HIDDEN), 1)

    ctx = None
    for h in range(NUM_HEADS):                        # static loop, NUM_HEADS == 2
        lo = h * HEAD_SIZE
        head_mask = ((lane >= lo) & (lane < lo + HEAD_SIZE)).astype(jnp.float32)
        # (q * head_mask) @ k^T contracts over the full hidden dim, but only
        # this head's lanes contribute; K=H=32 << 128 is MXU padding anyway.
        scores = lax.dot_general(
            q * head_mask, k, (((1,), (1,)), ((), ())),
            preferred_element_type=jnp.float32)
        scores = scores * inv_sqrt_hd + mask
        row_max = jnp.max(scores, axis=-1, keepdims=True)
        e = jnp.exp(scores - row_max)
        denom = jnp.sum(e, axis=-1, keepdims=True)
        probs = e / denom                             # exact softmax (fidelity)
        ctx_h = jnp.dot(probs, v * head_mask,
                        preferred_element_type=jnp.float32)   # head lanes only
        ctx = ctx_h if ctx is None else ctx + ctx_h   # heads live in disjoint lanes

    attn_out = (jnp.dot(ctx.astype(MXU_DTYPE), wd_ref[...],
                        preferred_element_type=jnp.float32)
                + bd_ref[...])
    gsp = _layernorm(attn_out + x, ln2_w_ref[...], ln2_b_ref[...])

    # ---------------- BSARecLayer combine ----------------
    hidden = ALPHA * dsp + (1.0 - ALPHA) * gsp

    # ---------------- FeedForward ----------------
    inter = (jnp.dot(hidden.astype(MXU_DTYPE), w1_ref[...],
                     preferred_element_type=jnp.float32)
             + b1_ref[...])
    inter = _gelu_erf(inter)
    ffn = (jnp.dot(inter.astype(MXU_DTYPE), w2_ref[...],
                   preferred_element_type=jnp.float32)
           + b2_ref[...])
    out = _layernorm(ffn + hidden, ln3_w_ref[...], ln3_b_ref[...])

    out_ref[0] = out.astype(out_ref.dtype)


# ------------------------------ wrapper ---------------------------------------
def _const_spec(shape):
    """Full-array block, same block for every grid step (weights / mask / lp)."""
    zeros = (0,) * len(shape)
    return pl.BlockSpec(shape, lambda b, _z=zeros: _z)


def make_lowpass_matrix(seq_len, c_keep):
    """Real (S, S) matrix M such that M @ x == irfft(keep_low(rfft(x, ortho)), ortho)."""
    eye = jnp.eye(seq_len, dtype=jnp.float32)
    xf = jnp.fft.rfft(eye, axis=0, norm="ortho")                    # (S//2+1, S)
    keep = (jnp.arange(seq_len // 2 + 1) < c_keep)[:, None]
    lp = jnp.fft.irfft(xf * keep, n=seq_len, axis=0, norm="ortho")  # (S, S)
    return lp.astype(jnp.float32)


@jax.jit
def bsarec_block(x, attn_mask, params):
    """x: (B, S, H); attn_mask: (S, S) additive causal mask; returns (B, S, H)."""
    B, S, H = x.shape

    # Fused QKV weight / bias (one DMA, one MXU push inside the kernel).
    w_qkv = jnp.concatenate(
        [params["wq"], params["wk"], params["wv"]], axis=1).astype(MXU_DTYPE)
    b_qkv = jnp.concatenate([params["bq"], params["bk"], params["bv"]], axis=1)

    args = [
        x,                                   # (B, S, H) - batch indexed
        attn_mask,                           # (S, S)    - shared
        params["lp"],                        # (S, S)    - shared
        params["sqrt_beta"],
        params["ln1_w"], params["ln1_b"],
        w_qkv, b_qkv,
        params["wd"].astype(MXU_DTYPE), params["bd"],
        params["ln2_w"], params["ln2_b"],
        params["w1"].astype(MXU_DTYPE), params["b1"],
        params["w2"].astype(MXU_DTYPE), params["b2"],
        params["ln3_w"], params["ln3_b"],
    ]

    in_specs = [pl.BlockSpec((1, S, H), lambda b: (b, 0, 0))]
    in_specs += [_const_spec(a.shape) for a in args[1:]]
    out_spec = pl.BlockSpec((1, S, H), lambda b: (b, 0, 0))

    flops = B * 2 * (S * S * H                           # low-pass matmul
                     + S * H * 3 * H                     # fused QKV projection
                     + NUM_HEADS * 2 * S * S * H         # scores + context
                     + S * H * H                         # attention dense
                     + 2 * S * H * INNER)                # FFN
    transcendentals = B * (NUM_HEADS * S * S + S * INNER)
    bytes_accessed = (sum(int(a.size) * a.dtype.itemsize for a in args)
                      + B * S * H * 4)

    out = pl.pallas_call(
        bsarec_block_kernel,
        out_shape=jax.ShapeDtypeStruct((B, S, H), x.dtype),
        grid=(B,),                                       # one batch element per step
        in_specs=in_specs,
        out_specs=out_spec,
        compiler_params=pltpu.CompilerParams(
            dimension_semantics=("parallel",),           # shard batch over TCs (v7x)
            vmem_limit_bytes=32 * 1024 * 1024,           # explicit; fits v7x budget
        ),
        cost_estimate=pl.CostEstimate(
            flops=flops,
            transcendentals=transcendentals,
            bytes_accessed=bytes_accessed,
        ),
    )(*args)

    return out


# --------------------------- pure-JAX reference --------------------------------
def bsarec_block_reference(x, attn_mask, params):
    """Pure-JAX mirror of the PyTorch BSARecBlock forward (eval mode)."""
    B, S, H = x.shape
    hp = lax.Precision.HIGHEST

    # FrequencyLayer
    xf = jnp.fft.rfft(x, axis=1, norm="ortho")
    keep = (jnp.arange(S // 2 + 1) < C_KEEP)[None, :, None]
    low = jnp.fft.irfft(xf * keep, n=S, axis=1, norm="ortho")
    sb = params["sqrt_beta"].reshape(1, 1, H)
    seq_fft = low + sb * sb * (x - low)
    dsp = _layernorm(seq_fft + x, params["ln1_w"].reshape(H), params["ln1_b"].reshape(H))

    # MultiHeadAttention
    def linear(t, w, b):
        return jnp.einsum("bsh,ho->bso", t, w, precision=hp) + b.reshape(1, 1, -1)

    def split_heads(t):
        return t.reshape(B, S, NUM_HEADS, HEAD_SIZE).transpose(0, 2, 1, 3)

    q = split_heads(linear(x, params["wq"], params["bq"]))
    k = split_heads(linear(x, params["wk"], params["bk"]))
    v = split_heads(linear(x, params["wv"], params["bv"]))
    scores = jnp.einsum("bnqd,bnkd->bnqk", q, k, precision=hp) / math.sqrt(HEAD_SIZE)
    scores = scores + attn_mask[None, None]
    probs = jax.nn.softmax(scores, axis=-1)
    ctx = jnp.einsum("bnqk,bnkd->bnqd", probs, v, precision=hp)
    ctx = ctx.transpose(0, 2, 1, 3).reshape(B, S, H)
    attn_out = (jnp.einsum("bsh,ho->bso", ctx, params["wd"], precision=hp)
                + params["bd"].reshape(1, 1, -1))
    gsp = _layernorm(attn_out + x, params["ln2_w"].reshape(H), params["ln2_b"].reshape(H))

    hidden = ALPHA * dsp + (1.0 - ALPHA) * gsp

    # FeedForward
    inter = _gelu_erf(jnp.einsum("bsh,hi->bsi", hidden, params["w1"], precision=hp)
                      + params["b1"].reshape(1, 1, -1))
    ffn = (jnp.einsum("bsi,ih->bsh", inter, params["w2"], precision=hp)
           + params["b2"].reshape(1, 1, -1))
    return _layernorm(ffn + hidden, params["ln3_w"].reshape(H), params["ln3_b"].reshape(H))


# ------------------------------- params ----------------------------------------
def init_params(key):
    """Deterministic parameter init matching the PyTorch module's shapes."""
    ks = jax.random.split(key, 8)
    std = 0.02

    def lin(k, fan_in, fan_out):
        kw, kb = jax.random.split(k)
        w = jax.random.normal(kw, (fan_in, fan_out), jnp.float32) * std
        b = jax.random.normal(kb, (1, fan_out), jnp.float32) * std
        return w, b

    wq, bq = lin(ks[0], HIDDEN, HIDDEN)
    wk, bk = lin(ks[1], HIDDEN, HIDDEN)
    wv, bv = lin(ks[2], HIDDEN, HIDDEN)
    wd, bd = lin(ks[3], HIDDEN, HIDDEN)
    w1, b1 = lin(ks[4], HIDDEN, INNER)
    w2, b2 = lin(ks[5], INNER, HIDDEN)

    return dict(
        lp=make_lowpass_matrix(SEQ, C_KEEP),
        sqrt_beta=jax.random.normal(ks[6], (1, HIDDEN), jnp.float32),
        ln1_w=jnp.ones((1, HIDDEN), jnp.float32),
        ln1_b=jnp.zeros((1, HIDDEN), jnp.float32),
        wq=wq, bq=bq, wk=wk, bk=bk, wv=wv, bv=bv,
        wd=wd, bd=bd,
        ln2_w=jnp.ones((1, HIDDEN), jnp.float32),
        ln2_b=jnp.zeros((1, HIDDEN), jnp.float32),
        w1=w1, b1=b1, w2=w2, b2=b2,
        ln3_w=jnp.ones((1, HIDDEN), jnp.float32),
        ln3_b=jnp.zeros((1, HIDDEN), jnp.float32),
    )


if __name__ == "__main__":
    key = jax.random.PRNGKey(0)
    k_x, k_p = jax.random.split(key)

    x = jax.random.normal(k_x, (BATCH, SEQ, HIDDEN), jnp.float32)

    # causal additive attention mask: 0 where attended, -10000 where masked
    causal = jnp.tril(jnp.ones((SEQ, SEQ), jnp.float32))
    attn_mask = (1.0 - causal) * MASK_VAL            # (S, S), shared across batch

    params = init_params(k_p)

    out = bsarec_block(x, attn_mask, params)
    out = jax.block_until_ready(out)

    assert out.shape == (BATCH, SEQ, HIDDEN)
    assert bool(jnp.all(jnp.isfinite(out)))

    # numerical self-check against the pure-JAX reference of the PyTorch module
    ref = bsarec_block_reference(x, attn_mask, params)
    assert bool(jnp.allclose(out, ref, atol=3e-2, rtol=3e-2)), float(
        jnp.max(jnp.abs(out - ref)))

    print("KERNEL_OK")
</pallas_src>

<mosaic_0001>
module attributes {stable_mosaic.version = 11 : i64} {
  func.func @bsarec_block_kernel(%arg0: i32, %arg1: memref<1x8x32xf32, #tpu.memory_space<vmem>>, %arg2: memref<8x8xf32, #tpu.memory_space<vmem>>, %arg3: memref<8x8xf32, #tpu.memory_space<vmem>>, %arg4: memref<1x32xf32, #tpu.memory_space<vmem>>, %arg5: memref<1x32xf32, #tpu.memory_space<vmem>>, %arg6: memref<1x32xf32, #tpu.memory_space<vmem>>, %arg7: memref<32x96xbf16, #tpu.memory_space<vmem>>, %arg8: memref<1x96xf32, #tpu.memory_space<vmem>>, %arg9: memref<32x32xbf16, #tpu.memory_space<vmem>>, %arg10: memref<1x32xf32, #tpu.memory_space<vmem>>, %arg11: memref<1x32xf32, #tpu.memory_space<vmem>>, %arg12: memref<1x32xf32, #tpu.memory_space<vmem>>, %arg13: memref<32x128xbf16, #tpu.memory_space<vmem>>, %arg14: memref<1x128xf32, #tpu.memory_space<vmem>>, %arg15: memref<128x32xbf16, #tpu.memory_space<vmem>>, %arg16: memref<1x32xf32, #tpu.memory_space<vmem>>, %arg17: memref<1x32xf32, #tpu.memory_space<vmem>>, %arg18: memref<1x32xf32, #tpu.memory_space<vmem>>, %arg19: memref<1x8x32xf32, #tpu.memory_space<vmem>>) attributes {dimension_semantics = [#tpu.dimension_semantics<parallel>], iteration_bounds = array<i64: 2>, scalar_prefetch = 0 : i64, scratch_operands = 0 : i64, tpu.core_type = #tpu.core_type<tc>, window_params = [{transform_indices = @transform_0, window_bounds = array<i64: 1, 8, 32>}, {pipeline_mode = #tpu.pipeline_mode<synchronous>, transform_indices = @transform_1, window_bounds = array<i64: 8, 8>}, {pipeline_mode = #tpu.pipeline_mode<synchronous>, transform_indices = @transform_2, window_bounds = array<i64: 8, 8>}, {pipeline_mode = #tpu.pipeline_mode<synchronous>, transform_indices = @transform_3, window_bounds = array<i64: 1, 32>}, {pipeline_mode = #tpu.pipeline_mode<synchronous>, transform_indices = @transform_4, window_bounds = array<i64: 1, 32>}, {pipeline_mode = #tpu.pipeline_mode<synchronous>, transform_indices = @transform_5, window_bounds = array<i64: 1, 32>}, {pipeline_mode = #tpu.pipeline_mode<synchronous>, transform_indices = @transform_6, window_bounds = array<i64: 32, 96>}, {pipeline_mode = #tpu.pipeline_mode<synchronous>, transform_indices = @transform_7, window_bounds = array<i64: 1, 96>}, {pipeline_mode = #tpu.pipeline_mode<synchronous>, transform_indices = @transform_8, window_bounds = array<i64: 32, 32>}, {pipeline_mode = #tpu.pipeline_mode<synchronous>, transform_indices = @transform_9, window_bounds = array<i64: 1, 32>}, {pipeline_mode = #tpu.pipeline_mode<synchronous>, transform_indices = @transform_10, window_bounds = array<i64: 1, 32>}, {pipeline_mode = #tpu.pipeline_mode<synchronous>, transform_indices = @transform_11, window_bounds = array<i64: 1, 32>}, {pipeline_mode = #tpu.pipeline_mode<synchronous>, transform_indices = @transform_12, window_bounds = array<i64: 32, 128>}, {pipeline_mode = #tpu.pipeline_mode<synchronous>, transform_indices = @transform_13, window_bounds = array<i64: 1, 128>}, {pipeline_mode = #tpu.pipeline_mode<synchronous>, transform_indices = @transform_14, window_bounds = array<i64: 128, 32>}, {pipeline_mode = #tpu.pipeline_mode<synchronous>, transform_indices = @transform_15, window_bounds = array<i64: 1, 32>}, {pipeline_mode = #tpu.pipeline_mode<synchronous>, transform_indices = @transform_16, window_bounds = array<i64: 1, 32>}, {pipeline_mode = #tpu.pipeline_mode<synchronous>, transform_indices = @transform_17, window_bounds = array<i64: 1, 32>}, {transform_indices = @transform_18, window_bounds = array<i64: 1, 8, 32>}]} {
    %c0 = arith.constant 0 : index
    %c0_0 = arith.constant 0 : index
    %c0_1 = arith.constant 0 : index
    %0 = vector.load %arg1[%c0, %c0_0, %c0_1] : memref<1x8x32xf32, #tpu.memory_space<vmem>>, vector<1x8x32xf32>
    %1 = vector.shape_cast %0 : vector<1x8x32xf32> to vector<8x32xf32>
    %c0_2 = arith.constant 0 : index
    %c0_3 = arith.constant 0 : index
    %2 = vector.load %arg2[%c0_2, %c0_3] : memref<8x8xf32, #tpu.memory_space<vmem>>, vector<8x8xf32>
    %c0_4 = arith.constant 0 : index
    %c0_5 = arith.constant 0 : index
    %3 = vector.load %arg3[%c0_4, %c0_5] : memref<8x8xf32, #tpu.memory_space<vmem>>, vector<8x8xf32>
    %cst = arith.constant dense<0.000000e+00> : vector<8x32xf32>
    %4 = tpu.matmul %3, %1, %cst {dimension_numbers = #tpu.dot_dimension_numbers<[1], [0], [0], [1], [0, 0, 1, 1], [], []>} : vector<8x8xf32>, vector<8x32xf32>, vector<8x32xf32> -> vector<8x32xf32>
    %c0_6 = arith.constant 0 : index
    %c0_7 = arith.constant 0 : index
    %5 = vector.load %arg4[%c0_6, %c0_7] : memref<1x32xf32, #tpu.memory_space<vmem>>, vector<1x32xf32>
    %6 = arith.mulf %5, %5 : vector<1x32xf32>
    %7 = arith.subf %1, %4 : vector<8x32xf32>
    %8 = vector.broadcast %6 : vector<1x32xf32> to vector<8x32xf32>
    %9 = arith.mulf %8, %7 : vector<8x32xf32>
    %10 = arith.addf %4, %9 : vector<8x32xf32>
    %11 = arith.addf %10, %1 : vector<8x32xf32>
    %c0_8 = arith.constant 0 : index
    %c0_9 = arith.constant 0 : index
    %12 = vector.load %arg5[%c0_8, %c0_9] : memref<1x32xf32, #tpu.memory_space<vmem>>, vector<1x32xf32>
    %c0_10 = arith.constant 0 : index
    %c0_11 = arith.constant 0 : index
    %13 = vector.load %arg6[%c0_10, %c0_11] : memref<1x32xf32, #tpu.memory_space<vmem>>, vector<1x32xf32>
    %cst_12 = arith.constant dense<0.000000e+00> : vector<8xf32>
    %14 = vector.multi_reduction <add>, %11, %cst_12 [1] : vector<8x32xf32> to vector<8xf32>
    %15 = vector.shape_cast %14 : vector<8xf32> to vector<8x1xf32>
    %cst_13 = arith.constant 3.200000e+01 : f32
    %16 = vector.broadcast %cst_13 : f32 to vector<8x1xf32>
    %17 = arith.divf %15, %16 : vector<8x1xf32>
    %18 = vector.broadcast %17 : vector<8x1xf32> to vector<8x32xf32>
    %19 = arith.subf %11, %18 : vector<8x32xf32>
    %20 = arith.mulf %19, %19 : vector<8x32xf32>
    %cst_14 = arith.constant dense<0.000000e+00> : vector<8xf32>
    %21 = vector.multi_reduction <add>, %20, %cst_14 [1] : vector<8x32xf32> to vector<8xf32>
    %22 = vector.shape_cast %21 : vector<8xf32> to vector<8x1xf32>
    %cst_15 = arith.constant 3.200000e+01 : f32
    %23 = vector.broadcast %cst_15 : f32 to vector<8x1xf32>
    %24 = arith.divf %22, %23 : vector<8x1xf32>
    %cst_16 = arith.constant 9.99999996E-13 : f32
    %25 = vector.broadcast %cst_16 : f32 to vector<8x1xf32>
    %26 = arith.addf %24, %25 : vector<8x1xf32>
    %27 = math.sqrt %26 : vector<8x1xf32>
    %28 = vector.broadcast %27 : vector<8x1xf32> to vector<8x32xf32>
    %29 = arith.divf %19, %28 : vector<8x32xf32>
    %30 = vector.broadcast %12 : vector<1x32xf32> to vector<8x32xf32>
    %31 = arith.mulf %30, %29 : vector<8x32xf32>
    %32 = vector.broadcast %13 : vector<1x32xf32> to vector<8x32xf32>
    %33 = arith.addf %31, %32 : vector<8x32xf32>
    %34 = arith.truncf %1 : vector<8x32xf32> to vector<8x32xbf16>
    %c0_17 = arith.constant 0 : index
    %c0_18 = arith.constant 0 : index
    %35 = vector.load %arg7[%c0_17, %c0_18] : memref<32x96xbf16, #tpu.memory_space<vmem>>, vector<32x96xbf16>
    %cst_19 = arith.constant dense<0.000000e+00> : vector<8x96xf32>
    %36 = tpu.matmul %34, %35, %cst_19 {dimension_numbers = #tpu.dot_dimension_numbers<[1], [0], [0], [1], [0, 0, 1, 1], [], []>} : vector<8x32xbf16>, vector<32x96xbf16>, vector<8x96xf32> -> vector<8x96xf32>
    %c0_20 = arith.constant 0 : index
    %c0_21 = arith.constant 0 : index
    %37 = vector.load %arg8[%c0_20, %c0_21] : memref<1x96xf32, #tpu.memory_space<vmem>>, vector<1x96xf32>
    %38 = vector.broadcast %37 : vector<1x96xf32> to vector<8x96xf32>
    %39 = arith.addf %36, %38 : vector<8x96xf32>
    %40 = vector.extract_strided_slice %39 {offsets = [0, 0], sizes = [8, 32], strides = [1, 1]} : vector<8x96xf32> to vector<8x32xf32>
    %41 = vector.extract_strided_slice %39 {offsets = [0, 32], sizes = [8, 32], strides = [1, 1]} : vector<8x96xf32> to vector<8x32xf32>
    %42 = vector.extract_strided_slice %39 {offsets = [0, 64], sizes = [8, 32], strides = [1, 1]} : vector<8x96xf32> to vector<8x32xf32>
    %43 = tpu.iota {dimensions = array<i32: 1>} : vector<1x32xi32>
    %c0_i32 = arith.constant 0 : i32
    %44 = vector.broadcast %c0_i32 : i32 to vector<1x32xi32>
    %45 = arith.cmpi sge, %43, %44 : vector<1x32xi32>
    %c16_i32 = arith.constant 16 : i32
    %46 = vector.broadcast %c16_i32 : i32 to vector<1x32xi32>
    %47 = arith.cmpi slt, %43, %46 : vector<1x32xi32>
    %48 = arith.andi %45, %47 : vector<1x32xi1>
    %49 = arith.extui %48 : vector<1x32xi1> to vector<1x32xi32>
    %50 = arith.sitofp %49 : vector<1x32xi32> to vector<1x32xf32>
    %51 = vector.broadcast %50 : vector<1x32xf32> to vector<8x32xf32>
    %52 = arith.mulf %40, %51 : vector<8x32xf32>
    %cst_22 = arith.constant dense<0.000000e+00> : vector<8x8xf32>
    %53 = tpu.matmul %52, %41, %cst_22 {dimension_numbers = #tpu.dot_dimension_numbers<[1], [1], [0], [0], [0, 0, 1, 0], [], []>} : vector<8x32xf32>, vector<8x32xf32>, vector<8x8xf32> -> vector<8x8xf32>
    %cst_23 = arith.constant 2.500000e-01 : f32
    %54 = vector.broadcast %cst_23 : f32 to vector<8x8xf32>
    %55 = arith.mulf %53, %54 : vector<8x8xf32>
    %56 = arith.addf %55, %2 : vector<8x8xf32>
    %cst_24 = arith.constant dense<0xFF800000> : vector<8xf32>
    %57 = vector.multi_reduction <maximumf>, %56, %cst_24 [1] : vector<8x8xf32> to vector<8xf32>
    %58 = vector.shape_cast %57 : vector<8xf32> to vector<8x1xf32>
    %59 = vector.broadcast %58 : vector<8x1xf32> to vector<8x8xf32>
    %60 = arith.subf %56, %59 : vector<8x8xf32>
    %61 = math.exp %60 : vector<8x8xf32>
    %cst_25 = arith.constant dense<0.000000e+00> : vector<8xf32>
    %62 = vector.multi_reduction <add>, %61, %cst_25 [1] : vector<8x8xf32> to vector<8xf32>
    %63 = vector.shape_cast %62 : vector<8xf32> to vector<8x1xf32>
    %64 = vector.broadcast %63 : vector<8x1xf32> to vector<8x8xf32>
    %65 = arith.divf %61, %64 : vector<8x8xf32>
    %66 = vector.broadcast %50 : vector<1x32xf32> to vector<8x32xf32>
    %67 = arith.mulf %42, %66 : vector<8x32xf32>
    %cst_26 = arith.constant dense<0.000000e+00> : vector<8x32xf32>
    %68 = tpu.matmul %65, %67, %cst_26 {dimension_numbers = #tpu.dot_dimension_numbers<[1], [0], [0], [1], [0, 0, 1, 1], [], []>} : vector<8x8xf32>, vector<8x32xf32>, vector<8x32xf32> -> vector<8x32xf32>
    %c16_i32_27 = arith.constant 16 : i32
    %69 = vector.broadcast %c16_i32_27 : i32 to vector<1x32xi32>
    %70 = arith.cmpi sge, %43, %69 : vector<1x32xi32>
    %c32_i32 = arith.constant 32 : i32
    %71 = vector.broadcast %c32_i32 : i32 to vector<1x32xi32>
    %72 = arith.cmpi slt, %43, %71 : vector<1x32xi32>
    %73 = arith.andi %70, %72 : vector<1x32xi1>
    %74 = arith.extui %73 : vector<1x32xi1> to vector<1x32xi32>
    %75 = arith.sitofp %74 : vector<1x32xi32> to vector<1x32xf32>
    %76 = vector.broadcast %75 : vector<1x32xf32> to vector<8x32xf32>
    %77 = arith.mulf %40, %76 : vector<8x32xf32>
    %cst_28 = arith.constant dense<0.000000e+00> : vector<8x8xf32>
    %78 = tpu.matmul %77, %41, %cst_28 {dimension_numbers = #tpu.dot_dimension_numbers<[1], [1], [0], [0], [0, 0, 1, 0], [], []>} : vector<8x32xf32>, vector<8x32xf32>, vector<8x8xf32> -> vector<8x8xf32>
    %cst_29 = arith.constant 2.500000e-01 : f32
    %79 = vector.broadcast %cst_29 : f32 to vector<8x8xf32>
    %80 = arith.mulf %78, %79 : vector<8x8xf32>
    %81 = arith.addf %80, %2 : vector<8x8xf32>
    %cst_30 = arith.constant dense<0xFF800000> : vector<8xf32>
    %82 = vector.multi_reduction <maximumf>, %81, %cst_30 [1] : vector<8x8xf32> to vector<8xf32>
    %83 = vector.shape_cast %82 : vector<8xf32> to vector<8x1xf32>
    %84 = vector.broadcast %83 : vector<8x1xf32> to vector<8x8xf32>
    %85 = arith.subf %81, %84 : vector<8x8xf32>
    %86 = math.exp %85 : vector<8x8xf32>
    %cst_31 = arith.constant dense<0.000000e+00> : vector<8xf32>
    %87 = vector.multi_reduction <add>, %86, %cst_31 [1] : vector<8x8xf32> to vector<8xf32>
    %88 = vector.shape_cast %87 : vector<8xf32> to vector<8x1xf32>
    %89 = vector.broadcast %88 : vector<8x1xf32> to vector<8x8xf32>
    %90 = arith.divf %86, %89 : vector<8x8xf32>
    %91 = vector.broadcast %75 : vector<1x32xf32> to vector<8x32xf32>
    %92 = arith.mulf %42, %91 : vector<8x32xf32>
    %cst_32 = arith.constant dense<0.000000e+00> : vector<8x32xf32>
    %93 = tpu.matmul %90, %92, %cst_32 {dimension_numbers = #tpu.dot_dimension_numbers<[1], [0], [0], [1], [0, 0, 1, 1], [], []>} : vector<8x8xf32>, vector<8x32xf32>, vector<8x32xf32> -> vector<8x32xf32>
    %94 = arith.addf %68, %93 : vector<8x32xf32>
    %95 = arith.truncf %94 : vector<8x32xf32> to vector<8x32xbf16>
    %c0_33 = arith.constant 0 : index
    %c0_34 = arith.constant 0 : index
    %96 = vector.load %arg9[%c0_33, %c0_34] : memref<32x32xbf16, #tpu.memory_space<vmem>>, vector<32x32xbf16>
    %cst_35 = arith.constant dense<0.000000e+00> : vector<8x32xf32>
    %97 = tpu.matmul %95, %96, %cst_35 {dimension_numbers = #tpu.dot_dimension_numbers<[1], [0], [0], [1], [0, 0, 1, 1], [], []>} : vector<8x32xbf16>, vector<32x32xbf16>, vector<8x32xf32> -> vector<8x32xf32>
    %c0_36 = arith.constant 0 : index
    %c0_37 = arith.constant 0 : index
    %98 = vector.load %arg10[%c0_36, %c0_37] : memref<1x32xf32, #tpu.memory_space<vmem>>, vector<1x32xf32>
    %99 = vector.broadcast %98 : vector<1x32xf32> to vector<8x32xf32>
    %100 = arith.addf %97, %99 : vector<8x32xf32>
    %101 = arith.addf %100, %1 : vector<8x32xf32>
    %c0_38 = arith.constant 0 : index
    %c0_39 = arith.constant 0 : index
    %102 = vector.load %arg11[%c0_38, %c0_39] : memref<1x32xf32, #tpu.memory_space<vmem>>, vector<1x32xf32>
    %c0_40 = arith.constant 0 : index
    %c0_41 = arith.constant 0 : index
    %103 = vector.load %arg12[%c0_40, %c0_41] : memref<1x32xf32, #tpu.memory_space<vmem>>, vector<1x32xf32>
    %cst_42 = arith.constant dense<0.000000e+00> : vector<8xf32>
    %104 = vector.multi_reduction <add>, %101, %cst_42 [1] : vector<8x32xf32> to vector<8xf32>
    %105 = vector.shape_cast %104 : vector<8xf32> to vector<8x1xf32>
    %cst_43 = arith.constant 3.200000e+01 : f32
    %106 = vector.broadcast %cst_43 : f32 to vector<8x1xf32>
    %107 = arith.divf %105, %106 : vector<8x1xf32>
    %108 = vector.broadcast %107 : vector<8x1xf32> to vector<8x32xf32>
    %109 = arith.subf %101, %108 : vector<8x32xf32>
    %110 = arith.mulf %109, %109 : vector<8x32xf32>
    %cst_44 = arith.constant dense<0.000000e+00> : vector<8xf32>
    %111 = vector.multi_reduction <add>, %110, %cst_44 [1] : vector<8x32xf32> to vector<8xf32>
    %112 = vector.shape_cast %111 : vector<8xf32> to vector<8x1xf32>
    %cst_45 = arith.constant 3.200000e+01 : f32
    %113 = vector.broadcast %cst_45 : f32 to vector<8x1xf32>
    %114 = arith.divf %112, %113 : vector<8x1xf32>
    %cst_46 = arith.constant 9.99999996E-13 : f32
    %115 = vector.broadcast %cst_46 : f32 to vector<8x1xf32>
    %116 = arith.addf %114, %115 : vector<8x1xf32>
    %117 = math.sqrt %116 : vector<8x1xf32>
    %118 = vector.broadcast %117 : vector<8x1xf32> to vector<8x32xf32>
    %119 = arith.divf %109, %118 : vector<8x32xf32>
    %120 = vector.broadcast %102 : vector<1x32xf32> to vector<8x32xf32>
    %121 = arith.mulf %120, %119 : vector<8x32xf32>
    %122 = vector.broadcast %103 : vector<1x32xf32> to vector<8x32xf32>
    %123 = arith.addf %121, %122 : vector<8x32xf32>
    %cst_47 = arith.constant 0.699999988 : f32
    %124 = vector.broadcast %cst_47 : f32 to vector<8x32xf32>
    %125 = arith.mulf %124, %33 : vector<8x32xf32>
    %cst_48 = arith.constant 3.000000e-01 : f32
    %126 = vector.broadcast %cst_48 : f32 to vector<8x32xf32>
    %127 = arith.mulf %126, %123 : vector<8x32xf32>
    %128 = arith.addf %125, %127 : vector<8x32xf32>
    %129 = arith.truncf %128 : vector<8x32xf32> to vector<8x32xbf16>
    %c0_49 = arith.constant 0 : index
    %c0_50 = arith.constant 0 : index
    %130 = vector.load %arg13[%c0_49, %c0_50] : memref<32x128xbf16, #tpu.memory_space<vmem>>, vector<32x128xbf16>
    %cst_51 = arith.constant dense<0.000000e+00> : vector<8x128xf32>
    %131 = tpu.matmul %129, %130, %cst_51 {dimension_numbers = #tpu.dot_dimension_numbers<[1], [0], [0], [1], [0, 0, 1, 1], [], []>} : vector<8x32xbf16>, vector<32x128xbf16>, vector<8x128xf32> -> vector<8x128xf32>
    %c0_52 = arith.constant 0 : index
    %c0_53 = arith.constant 0 : index
    %132 = vector.load %arg14[%c0_52, %c0_53] : memref<1x128xf32, #tpu.memory_space<vmem>>, vector<1x128xf32>
    %133 = vector.broadcast %132 : vector<1x128xf32> to vector<8x128xf32>
    %134 = arith.addf %131, %133 : vector<8x128xf32>
    %cst_54 = arith.constant 5.000000e-01 : f32
    %135 = vector.broadcast %cst_54 : f32 to vector<8x128xf32>
    %136 = arith.mulf %134, %135 : vector<8x128xf32>
    %cst_55 = arith.constant 1.41421354 : f32
    %137 = vector.broadcast %cst_55 : f32 to vector<8x128xf32>
    %138 = arith.divf %134, %137 : vector<8x128xf32>
    %139 = math.erf %138 : vector<8x128xf32>
    %cst_56 = arith.constant 1.000000e+00 : f32
    %140 = vector.broadcast %cst_56 : f32 to vector<8x128xf32>
    %141 = arith.addf %140, %139 : vector<8x128xf32>
    %142 = arith.mulf %136, %141 : vector<8x128xf32>
    %143 = arith.truncf %142 : vector<8x128xf32> to vector<8x128xbf16>
    %c0_57 = arith.constant 0 : index
    %c0_58 = arith.constant 0 : index
    %144 = vector.load %arg15[%c0_57, %c0_58] : memref<128x32xbf16, #tpu.memory_space<vmem>>, vector<128x32xbf16>
    %cst_59 = arith.constant dense<0.000000e+00> : vector<8x32xf32>
    %145 = tpu.matmul %143, %144, %cst_59 {dimension_numbers = #tpu.dot_dimension_numbers<[1], [0], [0], [1], [0, 0, 1, 1], [], []>} : vector<8x128xbf16>, vector<128x32xbf16>, vector<8x32xf32> -> vector<8x32xf32>
    %c0_60 = arith.constant 0 : index
    %c0_61 = arith.constant 0 : index
    %146 = vector.load %arg16[%c0_60, %c0_61] : memref<1x32xf32, #tpu.memory_space<vmem>>, vector<1x32xf32>
    %147 = vector.broadcast %146 : vector<1x32xf32> to vector<8x32xf32>
    %148 = arith.addf %145, %147 : vector<8x32xf32>
    %149 = arith.addf %148, %128 : vector<8x32xf32>
    %c0_62 = arith.constant 0 : index
    %c0_63 = arith.constant 0 : index
    %150 = vector.load %arg17[%c0_62, %c0_63] : memref<1x32xf32, #tpu.memory_space<vmem>>, vector<1x32xf32>
    %c0_64 = arith.constant 0 : index
    %c0_65 = arith.constant 0 : index
    %151 = vector.load %arg18[%c0_64, %c0_65] : memref<1x32xf32, #tpu.memory_space<vmem>>, vector<1x32xf32>
    %cst_66 = arith.constant dense<0.000000e+00> : vector<8xf32>
    %152 = vector.multi_reduction <add>, %149, %cst_66 [1] : vector<8x32xf32> to vector<8xf32>
    %153 = vector.shape_cast %152 : vector<8xf32> to vector<8x1xf32>
    %cst_67 = arith.constant 3.200000e+01 : f32
    %154 = vector.broadcast %cst_67 : f32 to vector<8x1xf32>
    %155 = arith.divf %153, %154 : vector<8x1xf32>
    %156 = vector.broadcast %155 : vector<8x1xf32> to vector<8x32xf32>
    %157 = arith.subf %149, %156 : vector<8x32xf32>
    %158 = arith.mulf %157, %157 : vector<8x32xf32>
    %cst_68 = arith.constant dense<0.000000e+00> : vector<8xf32>
    %159 = vector.multi_reduction <add>, %158, %cst_68 [1] : vector<8x32xf32> to vector<8xf32>
    %160 = vector.shape_cast %159 : vector<8xf32> to vector<8x1xf32>
    %cst_69 = arith.constant 3.200000e+01 : f32
    %161 = vector.broadcast %cst_69 : f32 to vector<8x1xf32>
    %162 = arith.divf %160, %161 : vector<8x1xf32>
    %cst_70 = arith.constant 9.99999996E-13 : f32
    %163 = vector.broadcast %cst_70 : f32 to vector<8x1xf32>
    %164 = arith.addf %162, %163 : vector<8x1xf32>
    %165 = math.sqrt %164 : vector<8x1xf32>
    %166 = vector.broadcast %165 : vector<8x1xf32> to vector<8x32xf32>
    %167 = arith.divf %157, %166 : vector<8x32xf32>
    %168 = vector.broadcast %150 : vector<1x32xf32> to vector<8x32xf32>
    %169 = arith.mulf %168, %167 : vector<8x32xf32>
    %170 = vector.broadcast %151 : vector<1x32xf32> to vector<8x32xf32>
    %171 = arith.addf %169, %170 : vector<8x32xf32>
    %c0_71 = arith.constant 0 : index
    %c0_72 = arith.constant 0 : index
    %c0_73 = arith.constant 0 : index
    %172 = vector.load %arg19[%c0_71, %c0_72, %c0_73] : memref<1x8x32xf32, #tpu.memory_space<vmem>>, vector<1x8x32xf32>
    %173 = vector.shape_cast %172 : vector<1x8x32xf32> to vector<8x32xf32>
    %174 = vector.shape_cast %171 : vector<8x32xf32> to vector<1x8x32xf32>
    tpu.vector_store %arg19[%c0_71, %c0_72, %c0_73], %174 {strides = array<i32>} : memref<1x8x32xf32, #tpu.memory_space<vmem>>, vector<1x8x32xf32>,
    return
  }
  func.func @transform_0(%arg0: i32) -> (i32, i32, i32) {
    %c0_i32 = arith.constant 0 : i32
    %c0_i32_0 = arith.constant 0 : i32
    %c0_i32_1 = arith.constant 0 : i32
    return %arg0, %c0_i32, %c0_i32_0 : i32, i32, i32
  }
  func.func @transform_1(%arg0: i32) -> (i32, i32) {
    %c0_i32 = arith.constant 0 : i32
    %c0_i32_0 = arith.constant 0 : i32
    %c0_i32_1 = arith.constant 0 : i32
    return %c0_i32, %c0_i32_0 : i32, i32
  }
  func.func @transform_2(%arg0: i32) -> (i32, i32) {
    %c0_i32 = arith.constant 0 : i32
    %c0_i32_0 = arith.constant 0 : i32
    %c0_i32_1 = arith.constant 0 : i32
    return %c0_i32, %c0_i32_0 : i32, i32
  }
  func.func @transform_3(%arg0: i32) -> (i32, i32) {
    %c0_i32 = arith.constant 0 : i32
    %c0_i32_0 = arith.constant 0 : i32
    %c0_i32_1 = arith.constant 0 : i32
    return %c0_i32, %c0_i32_0 : i32, i32
  }
  func.func @transform_4(%arg0: i32) -> (i32, i32) {
    %c0_i32 = arith.constant 0 : i32
    %c0_i32_0 = arith.constant 0 : i32
    %c0_i32_1 = arith.constant 0 : i32
    return %c0_i32, %c0_i32_0 : i32, i32
  }
  func.func @transform_5(%arg0: i32) -> (i32, i32) {
    %c0_i32 = arith.constant 0 : i32
    %c0_i32_0 = arith.constant 0 : i32
    %c0_i32_1 = arith.constant 0 : i32
    return %c0_i32, %c0_i32_0 : i32, i32
  }
  func.func @transform_6(%arg0: i32) -> (i32, i32) {
    %c0_i32 = arith.constant 0 : i32
    %c0_i32_0 = arith.constant 0 : i32
    %c0_i32_1 = arith.constant 0 : i32
    return %c0_i32, %c0_i32_0 : i32, i32
  }
  func.func @transform_7(%arg0: i32) -> (i32, i32) {
    %c0_i32 = arith.constant 0 : i32
    %c0_i32_0 = arith.constant 0 : i32
    %c0_i32_1 = arith.constant 0 : i32
    return %c0_i32, %c0_i32_0 : i32, i32
  }
  func.func @transform_8(%arg0: i32) -> (i32, i32) {
    %c0_i32 = arith.constant 0 : i32
    %c0_i32_0 = arith.constant 0 : i32
    %c0_i32_1 = arith.constant 0 : i32
    return %c0_i32, %c0_i32_0 : i32, i32
  }
  func.func @transform_9(%arg0: i32) -> (i32, i32) {
    %c0_i32 = arith.constant 0 : i32
    %c0_i32_0 = arith.constant 0 : i32
    %c0_i32_1 = arith.constant 0 : i32
    return %c0_i32, %c0_i32_0 : i32, i32
  }
  func.func @transform_10(%arg0: i32) -> (i32, i32) {
    %c0_i32 = arith.constant 0 : i32
    %c0_i32_0 = arith.constant 0 : i32
    %c0_i32_1 = arith.constant 0 : i32
    return %c0_i32, %c0_i32_0 : i32, i32
  }
  func.func @transform_11(%arg0: i32) -> (i32, i32) {
    %c0_i32 = arith.constant 0 : i32
    %c0_i32_0 = arith.constant 0 : i32
    %c0_i32_1 = arith.constant 0 : i32
    return %c0_i32, %c0_i32_0 : i32, i32
  }
  func.func @transform_12(%arg0: i32) -> (i32, i32) {
    %c0_i32 = arith.constant 0 : i32
    %c0_i32_0 = arith.constant 0 : i32
    %c0_i32_1 = arith.constant 0 : i32
    return %c0_i32, %c0_i32_0 : i32, i32
  }
  func.func @transform_13(%arg0: i32) -> (i32, i32) {
    %c0_i32 = arith.constant 0 : i32
    %c0_i32_0 = arith.constant 0 : i32
    %c0_i32_1 = arith.constant 0 : i32
    return %c0_i32, %c0_i32_0 : i32, i32
  }
  func.func @transform_14(%arg0: i32) -> (i32, i32) {
    %c0_i32 = arith.constant 0 : i32
    %c0_i32_0 = arith.constant 0 : i32
    %c0_i32_1 = arith.constant 0 : i32
    return %c0_i32, %c0_i32_0 : i32, i32
  }
  func.func @transform_15(%arg0: i32) -> (i32, i32) {
    %c0_i32 = arith.constant 0 : i32
    %c0_i32_0 = arith.constant 0 : i32
    %c0_i32_1 = arith.constant 0 : i32
    return %c0_i32, %c0_i32_0 : i32, i32
  }
  func.func @transform_16(%arg0: i32) -> (i32, i32) {
    %c0_i32 = arith.constant 0 : i32
    %c0_i32_0 = arith.constant 0 : i32
    %c0_i32_1 = arith.constant 0 : i32
    return %c0_i32, %c0_i32_0 : i32, i32
  }
  func.func @transform_17(%arg0: i32) -> (i32, i32) {
    %c0_i32 = arith.constant 0 : i32
    %c0_i32_0 = arith.constant 0 : i32
    %c0_i32_1 = arith.constant 0 : i32
    return %c0_i32, %c0_i32_0 : i32, i32
  }
  func.func @transform_18(%arg0: i32) -> (i32, i32, i32) {
    %c0_i32 = arith.constant 0 : i32
    %c0_i32_0 = arith.constant 0 : i32
    %c0_i32_1 = arith.constant 0 : i32
    return %arg0, %c0_i32, %c0_i32_0 : i32, i32, i32
  }
}

</mosaic_0001>

<llo_original>
// kernel: bsarec_block.1
$region0: #{bsarec_block.1}
  #allocation0 [shape = 'u32[]', space=smem, size = 0x4, offset = 0x4, fixed_abs, tag = 'smem constant byte address 0x4 - core index']
  #allocation1 [shape = 'u32[72,128]{1,0:T(1,128)}', space=vmem, size = 0x9000, scoped, tag = 'internal scratch']
  %s0 = inlined_call_operand.vmem [shape: f32[2,8,32], index: 0, kind: input, shape index: {}]
  %s1 = inlined_call_operand.vmem [shape: f32[8,8], index: 1, kind: input, shape index: {}]
  %s2 = inlined_call_operand.vmem [shape: f32[8,8], index: 2, kind: input, shape index: {}]
  %s3 = inlined_call_operand.vmem [shape: f32[1,32], index: 3, kind: input, shape index: {}]
  %s4 = inlined_call_operand.vmem [shape: f32[1,32], index: 4, kind: input, shape index: {}]
  %s5 = inlined_call_operand.vmem [shape: f32[1,32], index: 5, kind: input, shape index: {}]
  %s6 = inlined_call_operand.vmem [shape: bf16[32,96], index: 6, kind: input, shape index: {}]
  %s7 = inlined_call_operand.vmem [shape: f32[1,96], index: 7, kind: input, shape index: {}]
  %s8 = inlined_call_operand.vmem [shape: bf16[32,32], index: 8, kind: input, shape index: {}]
  %s9 = inlined_call_operand.vmem [shape: f32[1,32], index: 9, kind: input, shape index: {}]
  %s10 = inlined_call_operand.vmem [shape: f32[1,32], index: 10, kind: input, shape index: {}]
  %s11 = inlined_call_operand.vmem [shape: f32[1,32], index: 11, kind: input, shape index: {}]
  %s12 = inlined_call_operand.vmem [shape: bf16[32,128], index: 12, kind: input, shape index: {}]
  %s13 = inlined_call_operand.vmem [shape: f32[1,128], index: 13, kind: input, shape index: {}]
  %s14 = inlined_call_operand.vmem [shape: bf16[128,32], index: 14, kind: input, shape index: {}]
  %s15 = inlined_call_operand.vmem [shape: f32[1,32], index: 15, kind: input, shape index: {}]
  %s16 = inlined_call_operand.vmem [shape: f32[1,32], index: 16, kind: input, shape index: {}]
  %s17 = inlined_call_operand.vmem [shape: f32[1,32], index: 17, kind: input, shape index: {}]
  %s18 = inlined_call_operand.hbm [shape: f32[2,8,32], index: 18, kind: output, shape index: {}]
  %s19 = sld [smem:[#allocation0]]
  $region105: #{bsarec_block.1} parent=0
    _
  %s21 = ssub.s32 1, %s19
  %s22 = scalar_select 0, %s21, %s19
  $region1: #{bsarec_block.1} parent=0
    #allocation2 [shape = 'u8[8192]{0}', space=vmem, size = 0x2000, scoped, tag = 'output window, operand 0']
    #allocation3 [shape = 's32[2]{0}', space=sflag, size = 0x8, scoped, tag = 'scoped memory for bsarec_block.1']
    %23 = vsyncpa [#allocation3], 0
    %s24 = scalar_lea.sflag [#allocation3], 1
    %25 = vsyncpa %s24, 0
    loop: start=0, step=1, limit=4
    $region2: #{bsarec_block.1} parent=1 // loop_pre_header
      _
    $region3: #{bsarec_block.1} parent=1 // loop_header
      %s27 = sphi 0, %s31
      %p28 = scmp.ge.s32.totalorder %s27, 4
      %s37 = sphi 0, %s39
      %s40 = sphi 0, %s37
      %s41 = sphi 0, %s40
      %s57 = sphi 0, %s41
      %s61 = sphi 0, %s61
      %s63 = sphi 0, %s61
      %s64 = sphi 0, %s63
      %s78 = sphi 0, %s64
      %s82 = sphi 0, %s82
      %s84 = sphi 0, %s82
      %s85 = sphi 0, %s84
      %s99 = sphi 0, %s85
      %s103 = sphi 0, %s103
      %s105 = sphi 0, %s103
      %s106 = sphi 0, %s105
      %s120 = sphi 0, %s106
      %s124 = sphi 0, %s124
      %s126 = sphi 0, %s124
      %s127 = sphi 0, %s126
      %s141 = sphi 0, %s127
      %s145 = sphi 0, %s145
      %s147 = sphi 0, %s145
      %s148 = sphi 0, %s147
      %s162 = sphi 0, %s148
      %s166 = sphi 0, %s166
      %s168 = sphi 0, %s166
      %s169 = sphi 0, %s168
      %s183 = sphi 0, %s169
      %s187 = sphi 0, %s187
      %s189 = sphi 0, %s187
      %s190 = sphi 0, %s189
      %s204 = sphi 0, %s190
      %s208 = sphi 0, %s208
      %s210 = sphi 0, %s208
      %s211 = sphi 0, %s210
      %s225 = sphi 0, %s211
      %s229 = sphi 0, %s229
      %s231 = sphi 0, %s229
      %s232 = sphi 0, %s231
      %s246 = sphi 0, %s232
      %s250 = sphi 0, %s250
      %s252 = sphi 0, %s250
      %s253 = sphi 0, %s252
      %s267 = sphi 0, %s253
      %s271 = sphi 0, %s271
      %s273 = sphi 0, %s271
      %s274 = sphi 0, %s273
      %s288 = sphi 0, %s274
      %s292 = sphi 0, %s292
      %s294 = sphi 0, %s292
      %s295 = sphi 0, %s294
      %s309 = sphi 0, %s295
      %s313 = sphi 0, %s313
      %s315 = sphi 0, %s313
      %s316 = sphi 0, %s315
      %s330 = sphi 0, %s316
      %s334 = sphi 0, %s334
      %s336 = sphi 0, %s334
      %s337 = sphi 0, %s336
      %s351 = sphi 0, %s337
      %s355 = sphi 0, %s355
      %s357 = sphi 0, %s355
      %s358 = sphi 0, %s357
      %s372 = sphi 0, %s358
      %s376 = sphi 0, %s376
      %s378 = sphi 0, %s376
      %s379 = sphi 0, %s378
      %s393 = sphi 0, %s379
      %s397 = sphi 0, %s397
      %s399 = sphi 0, %s397
      %s400 = sphi 0, %s399
      %s414 = sphi 0, %s400
      %s420 = sphi 0, %s422
      %s423 = sphi 0, %s420
      %s424 = sphi 0, %s423
      %s440 = sphi 0, %s424
    $region4: #{bsarec_block.1} parent=1 // loop_header_branch
      %30 = sbr.rel (%p28) target = $region8
    $region5: #{bsarec_block.1} parent=1 // loop_body
      %s32 = ssub.s32 %s27, 1
      %s33 = ssub.s32 %s27, 2
      %s34 = sadd.s32 %s27, 1
      %s35 = ssub.s32 %s27, %s34
      %p36 = scmp.eq.s32.totalorder %s35, 0
      %s38 = sadd.s32 %s37, 1
      %s39 = scalar_select %p36, %s37, %s38
      %p42 = pneg %p36
      %p43 = scmp.eq.s32.totalorder %s27, 1
      %p44 = por %p42, %p43
      %p45 = scmp.ne.s32.totalorder %s37, %s40
      %p46 = scmp.eq.s32.totalorder %s27, 0
      %p47 = por %p45, %p46
      %p48 = scmp.ne.s32.totalorder %s37, %s40
      %p49 = scmp.eq.s32.totalorder %s32, 1
      %p50 = por %p48, %p49
      %p51 = scmp.ne.s32.totalorder %s40, %s41
      %p52 = scmp.eq.s32.totalorder %s32, 0
      %p53 = por %p51, %p52
      %p54 = scmp.ne.s32.totalorder %s40, %s41
      %p55 = scmp.eq.s32.totalorder %s33, 1
      %p56 = por %p54, %p55
      %p58 = scmp.ne.s32.totalorder %s41, %s57
      %p59 = scmp.eq.s32.totalorder %s33, 0
      %p60 = por %p58, %p59
      %s62 = sadd.s32 %s61, 1
      %p65 = scmp.eq.s32.totalorder %s27, 1
      %p66 = scmp.ne.s32.totalorder %s61, %s63
      %p67 = scmp.eq.s32.totalorder %s27, 0
      %p68 = por %p66, %p67
      %p69 = scmp.ne.s32.totalorder %s61, %s63
      %p70 = scmp.eq.s32.totalorder %s32, 1
      %p71 = por %p69, %p70
      %p72 = scmp.ne.s32.totalorder %s63, %s64
      %p73 = scmp.eq.s32.totalorder %s32, 0
      %p74 = por %p72, %p73
      %p75 = scmp.ne.s32.totalorder %s63, %s64
      %p76 = scmp.eq.s32.totalorder %s33, 1
      %p77 = por %p75, %p76
      %p79 = scmp.ne.s32.totalorder %s64, %s78
      %p80 = scmp.eq.s32.totalorder %s33, 0
      %p81 = por %p79, %p80
      %s83 = sadd.s32 %s82, 1
      %p86 = scmp.eq.s32.totalorder %s27, 1
      %p87 = scmp.ne.s32.totalorder %s82, %s84
      %p88 = scmp.eq.s32.totalorder %s27, 0
      %p89 = por %p87, %p88
      %p90 = scmp.ne.s32.totalorder %s82, %s84
      %p91 = scmp.eq.s32.totalorder %s32, 1
      %p92 = por %p90, %p91
      %p93 = scmp.ne.s32.totalorder %s84, %s85
      %p94 = scmp.eq.s32.totalorder %s32, 0
      %p95 = por %p93, %p94
      %p96 = scmp.ne.s32.totalorder %s84, %s85
      %p97 = scmp.eq.s32.totalorder %s33, 1
      %p98 = por %p96, %p97
      %p100 = scmp.ne.s32.totalorder %s85, %s99
      %p101 = scmp.eq.s32.totalorder %s33, 0
      %p102 = por %p100, %p101
      %s104 = sadd.s32 %s103, 1
      %p107 = scmp.eq.s32.totalorder %s27, 1
      %p108 = scmp.ne.s32.totalorder %s103, %s105
      %p109 = scmp.eq.s32.totalorder %s27, 0
      %p110 = por %p108, %p109
      %p111 = scmp.ne.s32.totalorder %s103, %s105
      %p112 = scmp.eq.s32.totalorder %s32, 1
      %p113 = por %p111, %p112
      %p114 = scmp.ne.s32.totalorder %s105, %s106
      %p115 = scmp.eq.s32.totalorder %s32, 0
      %p116 = por %p114, %p115
      %p117 = scmp.ne.s32.totalorder %s105, %s106
      %p118 = scmp.eq.s32.totalorder %s33, 1
      %p119 = por %p117, %p118
      %p121 = scmp.ne.s32.totalorder %s106, %s120
      %p122 = scmp.eq.s32.totalorder %s33, 0
      %p123 = por %p121, %p122
      %s125 = sadd.s32 %s124, 1
      %p128 = scmp.eq.s32.totalorder %s27, 1
      %p129 = scmp.ne.s32.totalorder %s124, %s126
      %p130 = scmp.eq.s32.totalorder %s27, 0
      %p131 = por %p129, %p130
      %p132 = scmp.ne.s32.totalorder %s124, %s126
      %p133 = scmp.eq.s32.totalorder %s32, 1
      %p134 = por %p132, %p133
      %p135 = scmp.ne.s32.totalorder %s126, %s127
      %p136 = scmp.eq.s32.totalorder %s32, 0
      %p137 = por %p135, %p136
      %p138 = scmp.ne.s32.totalorder %s126, %s127
      %p139 = scmp.eq.s32.totalorder %s33, 1
      %p140 = por %p138, %p139
      %p142 = scmp.ne.s32.totalorder %s127, %s141
      %p143 = scmp.eq.s32.totalorder %s33, 0
      %p144 = por %p142, %p143
      %s146 = sadd.s32 %s145, 1
      %p149 = scmp.eq.s32.totalorder %s27, 1
      %p150 = scmp.ne.s32.totalorder %s145, %s147
      %p151 = scmp.eq.s32.totalorder %s27, 0
      %p152 = por %p150, %p151
      %p153 = scmp.ne.s32.totalorder %s145, %s147
      %p154 = scmp.eq.s32.totalorder %s32, 1
      %p155 = por %p153, %p154
      %p156 = scmp.ne.s32.totalorder %s147, %s148
      %p157 = scmp.eq.s32.totalorder %s32, 0
      %p158 = por %p156, %p157
      %p159 = scmp.ne.s32.totalorder %s147, %s148
      %p160 = scmp.eq.s32.totalorder %s33, 1
      %p161 = por %p159, %p160
      %p163 = scmp.ne.s32.totalorder %s148, %s162
      %p164 = scmp.eq.s32.totalorder %s33, 0
      %p165 = por %p163, %p164
      %s167 = sadd.s32 %s166, 1
      %p170 = scmp.eq.s32.totalorder %s27, 1
      %p171 = scmp.ne.s32.totalorder %s166, %s168
      %p172 = scmp.eq.s32.totalorder %s27, 0
      %p173 = por %p171, %p172
      %p174 = scmp.ne.s32.totalorder %s166, %s168
      %p175 = scmp.eq.s32.totalorder %s32, 1
      %p176 = por %p174, %p175
      %p177 = scmp.ne.s32.totalorder %s168, %s169
      %p178 = scmp.eq.s32.totalorder %s32, 0
      %p179 = por %p177, %p178
      %p180 = scmp.ne.s32.totalorder %s168, %s169
      %p181 = scmp.eq.s32.totalorder %s33, 1
      %p182 = por %p180, %p181
      %p184 = scmp.ne.s32.totalorder %s169, %s183
      %p185 = scmp.eq.s32.totalorder %s33, 0
      %p186 = por %p184, %p185
      %s188 = sadd.s32 %s187, 1
      %p191 = scmp.eq.s32.totalorder %s27, 1
      %p192 = scmp.ne.s32.totalorder %s187, %s189
      %p193 = scmp.eq.s32.totalorder %s27, 0
      %p194 = por %p192, %p193
      %p195 = scmp.ne.s32.totalorder %s187, %s189
      %p196 = scmp.eq.s32.totalorder %s32, 1
      %p197 = por %p195, %p196
      %p198 = scmp.ne.s32.totalorder %s189, %s190
      %p199 = scmp.eq.s32.totalorder %s32, 0
      %p200 = por %p198, %p199
      %p201 = scmp.ne.s32.totalorder %s189, %s190
      %p202 = scmp.eq.s32.totalorder %s33, 1
      %p203 = por %p201, %p202
      %p205 = scmp.ne.s32.totalorder %s190, %s204
      %p206 = scmp.eq.s32.totalorder %s33, 0
      %p207 = por %p205, %p206
      %s209 = sadd.s32 %s208, 1
      %p212 = scmp.eq.s32.totalorder %s27, 1
      %p213 = scmp.ne.s32.totalorder %s208, %s210
      %p214 = scmp.eq.s32.totalorder %s27, 0
      %p215 = por %p213, %p214
      %p216 = scmp.ne.s32.totalorder %s208, %s210
      %p217 = scmp.eq.s32.totalorder %s32, 1
      %p218 = por %p216, %p217
      %p219 = scmp.ne.s32.totalorder %s210, %s211
      %p220 = scmp.eq.s32.totalorder %s32, 0
      %p221 = por %p219, %p220
      %p222 = scmp.ne.s32.totalorder %s210, %s211
      %p223 = scmp.eq.s32.totalorder %s33, 1
      %p224 = por %p222, %p223
      %p226 = scmp.ne.s32.totalorder %s211, %s225
      %p227 = scmp.eq.s32.totalorder %s33, 0
      %p228 = por %p226, %p227
      %s230 = sadd.s32 %s229, 1
      %p233 = scmp.eq.s32.totalorder %s27, 1
      %p234 = scmp.ne.s32.totalorder %s229, %s231
      %p235 = scmp.eq.s32.totalorder %s27, 0
      %p236 = por %p234, %p235
      %p237 = scmp.ne.s32.totalorder %s229, %s231
      %p238 = scmp.eq.s32.totalorder %s32, 1
      %p239 = por %p237, %p238
      %p240 = scmp.ne.s32.totalorder %s231, %s232
      %p241 = scmp.eq.s32.totalorder %s32, 0
      %p242 = por %p240, %p241
      %p243 = scmp.ne.s32.totalorder %s231, %s232
      %p244 = scmp.eq.s32.totalorder %s33, 1
      %p245 = por %p243, %p244
      %p247 = scmp.ne.s32.totalorder %s232, %s246
      %p248 = scmp.eq.s32.totalorder %s33, 0
      %p249 = por %p247, %p248
      %s251 = sadd.s32 %s250, 1
      %p254 = scmp.eq.s32.totalorder %s27, 1
      %p255 = scmp.ne.s32.totalorder %s250, %s252
      %p256 = scmp.eq.s32.totalorder %s27, 0
      %p257 = por %p255, %p256
      %p258 = scmp.ne.s32.totalorder %s250, %s252
      %p259 = scmp.eq.s32.totalorder %s32, 1
      %p260 = por %p258, %p259
      %p261 = scmp.ne.s32.totalorder %s252, %s253
      %p262 = scmp.eq.s32.totalorder %s32, 0
      %p263 = por %p261, %p262
      %p264 = scmp.ne.s32.totalorder %s252, %s253
      %p265 = scmp.eq.s32.totalorder %s33, 1
      %p266 = por %p264, %p265
      %p268 = scmp.ne.s32.totalorder %s253, %s267
      %p269 = scmp.eq.s32.totalorder %s33, 0
      %p270 = por %p268, %p269
      %s272 = sadd.s32 %s271, 1
      %p275 = scmp.eq.s32.totalorder %s27, 1
      %p276 = scmp.ne.s32.totalorder %s271, %s273
      %p277 = scmp.eq.s32.totalorder %s27, 0
      %p278 = por %p276, %p277
      %p279 = scmp.ne.s32.totalorder %s271, %s273
      %p280 = scmp.eq.s32.totalorder %s32, 1
      %p281 = por %p279, %p280
      %p282 = scmp.ne.s32.totalorder %s273, %s274
      %p283 = scmp.eq.s32.totalorder %s32, 0
      %p284 = por %p282, %p283
      %p285 = scmp.ne.s32.totalorder %s273, %s274
      %p286 = scmp.eq.s32.totalorder %s33, 1
      %p287 = por %p285, %p286
      %p289 = scmp.ne.s32.totalorder %s274, %s288
      %p290 = scmp.eq.s32.totalorder %s33, 0
      %p291 = por %p289, %p290
      %s293 = sadd.s32 %s292, 1
      %p296 = scmp.eq.s32.totalorder %s27, 1
      %p297 = scmp.ne.s32.totalorder %s292, %s294
      %p298 = scmp.eq.s32.totalorder %s27, 0
      %p299 = por %p297, %p298
      %p300 = scmp.ne.s32.totalorder %s292, %s294
      %p301 = scmp.eq.s32.totalorder %s32, 1
      %p302 = por %p300, %p301
      %p303 = scmp.ne.s32.totalorder %s294, %s295
      %p304 = scmp.eq.s32.totalorder %s32, 0
      %p305 = por %p303, %p304
      %p306 = scmp.ne.s32.totalorder %s294, %s295
      %p307 = scmp.eq.s32.totalorder %s33, 1
      %p308 = por %p306, %p307
      %p310 = scmp.ne.s32.totalorder %s295, %s309
      %p311 = scmp.eq.s32.totalorder %s33, 0
      %p312 = por %p310, %p311
      %s314 = sadd.s32 %s313, 1
      %p317 = scmp.eq.s32.totalorder %s27, 1
      %p318 = scmp.ne.s32.totalorder %s313, %s315
      %p319 = scmp.eq.s32.totalorder %s27, 0
      %p320 = por %p318, %p319
      %p321 = scmp.ne.s32.totalorder %s313, %s315
      %p322 = scmp.eq.s32.totalorder %s32, 1
      %p323 = por %p321, %p322
      %p324 = scmp.ne.s32.totalorder %s315, %s316
      %p325 = scmp.eq.s32.totalorder %s32, 0
      %p326 = por %p324, %p325
      %p327 = scmp.ne.s32.totalorder %s315, %s316
      %p328 = scmp.eq.s32.totalorder %s33, 1
      %p329 = por %p327, %p328
      %p331 = scmp.ne.s32.totalorder %s316, %s330
      %p332 = scmp.eq.s32.totalorder %s33, 0
      %p333 = por %p331, %p332
      %s335 = sadd.s32 %s334, 1
      %p338 = scmp.eq.s32.totalorder %s27, 1
      %p339 = scmp.ne.s32.totalorder %s334, %s336
      %p340 = scmp.eq.s32.totalorder %s27, 0
      %p341 = por %p339, %p340
      %p342 = scmp.ne.s32.totalorder %s334, %s336
      %p343 = scmp.eq.s32.totalorder %s32, 1
      %p344 = por %p342, %p343
      %p345 = scmp.ne.s32.totalorder %s336, %s337
      %p346 = scmp.eq.s32.totalorder %s32, 0
      %p347 = por %p345, %p346
      %p348 = scmp.ne.s32.totalorder %s336, %s337
      %p349 = scmp.eq.s32.totalorder %s33, 1
      %p350 = por %p348, %p349
      %p352 = scmp.ne.s32.totalorder %s337, %s351
      %p353 = scmp.eq.s32.totalorder %s33, 0
      %p354 = por %p352, %p353
      %s356 = sadd.s32 %s355, 1
      %p359 = scmp.eq.s32.totalorder %s27, 1
      %p360 = scmp.ne.s32.totalorder %s355, %s357
      %p361 = scmp.eq.s32.totalorder %s27, 0
      %p362 = por %p360, %p361
      %p363 = scmp.ne.s32.totalorder %s355, %s357
      %p364 = scmp.eq.s32.totalorder %s32, 1
      %p365 = por %p363, %p364
      %p366 = scmp.ne.s32.totalorder %s357, %s358
      %p367 = scmp.eq.s32.totalorder %s32, 0
      %p368 = por %p366, %p367
      %p369 = scmp.ne.s32.totalorder %s357, %s358
      %p370 = scmp.eq.s32.totalorder %s33, 1
      %p371 = por %p369, %p370
      %p373 = scmp.ne.s32.totalorder %s358, %s372
      %p374 = scmp.eq.s32.totalorder %s33, 0
      %p375 = por %p373, %p374
      %s377 = sadd.s32 %s376, 1
      %p380 = scmp.eq.s32.totalorder %s27, 1
      %p381 = scmp.ne.s32.totalorder %s376, %s378
      %p382 = scmp.eq.s32.totalorder %s27, 0
      %p383 = por %p381, %p382
      %p384 = scmp.ne.s32.totalorder %s376, %s378
      %p385 = scmp.eq.s32.totalorder %s32, 1
      %p386 = por %p384, %p385
      %p387 = scmp.ne.s32.totalorder %s378, %s379
      %p388 = scmp.eq.s32.totalorder %s32, 0
      %p389 = por %p387, %p388
      %p390 = scmp.ne.s32.totalorder %s378, %s379
      %p391 = scmp.eq.s32.totalorder %s33, 1
      %p392 = por %p390, %p391
      %p394 = scmp.ne.s32.totalorder %s379, %s393
      %p395 = scmp.eq.s32.totalorder %s33, 0
      %p396 = por %p394, %p395
      %s398 = sadd.s32 %s397, 1
      %p401 = scmp.eq.s32.totalorder %s27, 1
      %p402 = scmp.ne.s32.totalorder %s397, %s399
      %p403 = scmp.eq.s32.totalorder %s27, 0
      %p404 = por %p402, %p403
      %p405 = scmp.ne.s32.totalorder %s397, %s399
      %p406 = scmp.eq.s32.totalorder %s32, 1
      %p407 = por %p405, %p406
      %p408 = scmp.ne.s32.totalorder %s399, %s400
      %p409 = scmp.eq.s32.totalorder %s32, 0
      %p410 = por %p408, %p409
      %p411 = scmp.ne.s32.totalorder %s399, %s400
      %p412 = scmp.eq.s32.totalorder %s33, 1
      %p413 = por %p411, %p412
      %p415 = scmp.ne.s32.totalorder %s400, %s414
      %p416 = scmp.eq.s32.totalorder %s33, 0
      %p417 = por %p415, %p416
      %s418 = ssub.s32 %s27, %s34
      %p419 = scmp.eq.s32.totalorder %s418, 0
      %s421 = sadd.s32 %s420, 1
      %s422 = scalar_select %p419, %s420, %s421
      %p425 = pneg %p419
      %p426 = scmp.eq.s32.totalorder %s27, 1
      %p427 = por %p425, %p426
      %p428 = scmp.ne.s32.totalorder %s420, %s423
      %p429 = scmp.eq.s32.totalorder %s27, 0
      %p430 = por %p428, %p429
      %p431 = scmp.ne.s32.totalorder %s420, %s423
      %p432 = scmp.eq.s32.totalorder %s32, 1
      %p433 = por %p431, %p432
      %p434 = scmp.ne.s32.totalorder %s423, %s424
      %p435 = scmp.eq.s32.totalorder %s32, 0
      %p436 = por %p434, %p435
      %p437 = scmp.ne.s32.totalorder %s423, %s424
      %p438 = scmp.eq.s32.totalorder %s33, 1
      %p439 = por %p437, %p438
      %p441 = scmp.ne.s32.totalorder %s424, %s440
      %p442 = scmp.eq.s32.totalorder %s33, 0
      %p443 = por %p441, %p442
      %p444 = scmp.le.s32.totalorder 1, %s27
      %p445 = scmp.lt.s32.totalorder %s27, 3
      %p446 = pnand %p444, %p445
      %p447 = pneg %p446
      // Predicated region
      $region9: #{bsarec_block.1} parent=5 // pred_check
        _
      $region10: #{bsarec_block.1} parent=5 // pred_check_branch
        %449 = sbr.rel (%p446) target = $region12
      $region11: #{bsarec_block.1} parent=5 // pred_region
        %s450 = ssub.s32 %s27, 1
        // Predicated region
        $region13: #{bsarec_block.1} parent=11 // pred_check
          %p451 = pneg %p74
        $region14: #{bsarec_block.1} parent=11 // pred_check_branch
          %453 = sbr.rel (%p451) target = $region16
        $region15: #{bsarec_block.1} parent=11 // pred_region
          _
        $region16: #{bsarec_block.1} parent=11 // pred_fallthru
          _
        // Predicated region
        $region17: #{bsarec_block.1} parent=11 // pred_check
          %p454 = pneg %p95
        $region18: #{bsarec_block.1} parent=11 // pred_check_branch
          %456 = sbr.rel (%p454) target = $region20
        $region19: #{bsarec_block.1} parent=11 // pred_region
          _
        $region20: #{bsarec_block.1} parent=11 // pred_fallthru
          _
        // Predicated region
        $region21: #{bsarec_block.1} parent=11 // pred_check
          %p457 = pneg %p116
        $region22: #{bsarec_block.1} parent=11 // pred_check_branch
          %459 = sbr.rel (%p457) target = $region24
        $region23: #{bsarec_block.1} parent=11 // pred_region
          _
        $region24: #{bsarec_block.1} parent=11 // pred_fallthru
          _
        // Predicated region
        $region25: #{bsarec_block.1} parent=11 // pred_check
          %p460 = pneg %p137
        $region26: #{bsarec_block.1} parent=11 // pred_check_branch
          %462 = sbr.rel (%p460) target = $region28
        $region27: #{bsarec_block.1} parent=11 // pred_region
          _
        $region28: #{bsarec_block.1} parent=11 // pred_fallthru
          _
        // Predicated region
        $region29: #{bsarec_block.1} parent=11 // pred_check
          %p463 = pneg %p158
        $region30: #{bsarec_block.1} parent=11 // pred_check_branch
          %465 = sbr.rel (%p463) target = $region32
        $region31: #{bsarec_block.1} parent=11 // pred_region
          _
        $region32: #{bsarec_block.1} parent=11 // pred_fallthru
          _
        // Predicated region
        $region33: #{bsarec_block.1} parent=11 // pred_check
          %p466 = pneg %p179
        $region34: #{bsarec_block.1} parent=11 // pred_check_branch
          %468 = sbr.rel (%p466) target = $region36
        $region35: #{bsarec_block.1} parent=11 // pred_region
          _
        $region36: #{bsarec_block.1} parent=11 // pred_fallthru
          _
        // Predicated region
        $region37: #{bsarec_block.1} parent=11 // pred_check
          %p469 = pneg %p200
        $region38: #{bsarec_block.1} parent=11 // pred_check_branch
          %471 = sbr.rel (%p469) target = $region40
        $region39: #{bsarec_block.1} parent=11 // pred_region
          _
        $region40: #{bsarec_block.1} parent=11 // pred_fallthru
          _
        // Predicated region
        $region41: #{bsarec_block.1} parent=11 // pred_check
          %p472 = pneg %p221
        $region42: #{bsarec_block.1} parent=11 // pred_check_branch
          %474 = sbr.rel (%p472) target = $region44
        $region43: #{bsarec_block.1} parent=11 // pred_region
          _
        $region44: #{bsarec_block.1} parent=11 // pred_fallthru
          _
        // Predicated region
        $region45: #{bsarec_block.1} parent=11 // pred_check
          %p475 = pneg %p242
        $region46: #{bsarec_block.1} parent=11 // pred_check_branch
          %477 = sbr.rel (%p475) target = $region48
        $region47: #{bsarec_block.1} parent=11 // pred_region
          _
        $region48: #{bsarec_block.1} parent=11 // pred_fallthru
          _
        // Predicated region
        $region49: #{bsarec_block.1} parent=11 // pred_check
          %p478 = pneg %p263
        $region50: #{bsarec_block.1} parent=11 // pred_check_branch
          %480 = sbr.rel (%p478) target = $region52
        $region51: #{bsarec_block.1} parent=11 // pred_region
          _
        $region52: #{bsarec_block.1} parent=11 // pred_fallthru
          _
        // Predicated region
        $region53: #{bsarec_block.1} parent=11 // pred_check
          %p481 = pneg %p284
        $region54: #{bsarec_block.1} parent=11 // pred_check_branch
          %483 = sbr.rel (%p481) target = $region56
        $region55: #{bsarec_block.1} parent=11 // pred_region
          _
        $region56: #{bsarec_block.1} parent=11 // pred_fallthru
          _
        // Predicated region
        $region57: #{bsarec_block.1} parent=11 // pred_check
          %p484 = pneg %p305
        $region58: #{bsarec_block.1} parent=11 // pred_check_branch
          %486 = sbr.rel (%p484) target = $region60
        $region59: #{bsarec_block.1} parent=11 // pred_region
          _
        $region60: #{bsarec_block.1} parent=11 // pred_fallthru
          _
        // Predicated region
        $region61: #{bsarec_block.1} parent=11 // pred_check
          %p487 = pneg %p326
        $region62: #{bsarec_block.1} parent=11 // pred_check_branch
          %489 = sbr.rel (%p487) target = $region64
        $region63: #{bsarec_block.1} parent=11 // pred_region
          _
        $region64: #{bsarec_block.1} parent=11 // pred_fallthru
          _
        // Predicated region
        $region65: #{bsarec_block.1} parent=11 // pred_check
          %p490 = pneg %p347
        $region66: #{bsarec_block.1} parent=11 // pred_check_branch
          %492 = sbr.rel (%p490) target = $region68
        $region67: #{bsarec_block.1} parent=11 // pred_region
          _
        $region68: #{bsarec_block.1} parent=11 // pred_fallthru
          _
        // Predicated region
        $region69: #{bsarec_block.1} parent=11 // pred_check
          %p493 = pneg %p368
        $region70: #{bsarec_block.1} parent=11 // pred_check_branch
          %495 = sbr.rel (%p493) target = $region72
        $region71: #{bsarec_block.1} parent=11 // pred_region
          _
        $region72: #{bsarec_block.1} parent=11 // pred_fallthru
          _
        // Predicated region
        $region73: #{bsarec_block.1} parent=11 // pred_check
          %p496 = pneg %p389
        $region74: #{bsarec_block.1} parent=11 // pred_check_branch
          %498 = sbr.rel (%p496) target = $region76
        $region75: #{bsarec_block.1} parent=11 // pred_region
          _
        $region76: #{bsarec_block.1} parent=11 // pred_fallthru
          _
        // Predicated region
        $region77: #{bsarec_block.1} parent=11 // pred_check
          %p499 = pneg %p410
        $region78: #{bsarec_block.1} parent=11 // pred_check_branch
          %501 = sbr.rel (%p499) target = $region80
        $region79: #{bsarec_block.1} parent=11 // pred_region
          _
        $region80: #{bsarec_block.1} parent=11 // pred_fallthru
          _
      $region12: #{bsarec_block.1} parent=5 // pred_fallthru
        _
      %p502 = scmp.lt.s32.totalorder %s27, 2
      // Predicated region
      $region81: #{bsarec_block.1} parent=5 // pred_check
        %p503 = pneg %p502
      $region82: #{bsarec_block.1} parent=5 // pred_check_branch
        %505 = sbr.rel (%p503) target = $region84
      $region83: #{bsarec_block.1} parent=5 // pred_region
        // Predicated region
        $region85: #{bsarec_block.1} parent=83 // pred_check
          %p506 = pneg %p47
        $region86: #{bsarec_block.1} parent=83 // pred_check_branch
          %508 = sbr.rel (%p506) target = $region88
        $region87: #{bsarec_block.1} parent=83 // pred_region
          %p509 = scmp.lt.s32.totalorder %s27, 1
          %s510 = scalar_select %p509, %s27, 1
          %s511 = smul.addr %s510, 8
          %s512 = scalar_lea.vmem %s0, %s511
        $region88: #{bsarec_block.1} parent=83 // pred_fallthru
          _
      $region84: #{bsarec_block.1} parent=5 // pred_fallthru
        _
      %p513 = scmp.le.s32.totalorder 1, %s27
      %p514 = scmp.lt.s32.totalorder %s27, 3
      %p515 = pnand %p513, %p514
      %p516 = pneg %p515
      // Predicated region
      $region89: #{bsarec_block.1} parent=5 // pred_check
        _
      $region90: #{bsarec_block.1} parent=5 // pred_check_branch
        %518 = sbr.rel (%p515) target = $region92
      $region91: #{bsarec_block.1} parent=5 // pred_region
        %s519 = ssub.s32 %s27, 1
        %p520 = scmp.lt.s32.totalorder %s32, 1
        %s521 = scalar_select %p520, %s32, 1
        %s522 = smul.addr %s521, 8
        %s523 = scalar_lea.vmem %s0, %s522
        %p524 = pneg %p53
        %p525 = pneg %p50
        %p526 = pneg %p74
        %p527 = pneg %p71
        %p528 = pneg %p95
        %p529 = pneg %p92
        %p530 = pneg %p116
        %p531 = pneg %p113
        %p532 = pneg %p137
        %p533 = pneg %p134
        %p534 = pneg %p158
        %p535 = pneg %p155
        %p536 = pneg %p179
        %p537 = pneg %p176
        %p538 = pneg %p200
        %p539 = pneg %p197
        %p540 = pneg %p221
        %p541 = pneg %p218
        %p542 = pneg %p242
        %p543 = pneg %p239
        %p544 = pneg %p263
        %p545 = pneg %p260
        %p546 = pneg %p284
        %p547 = pneg %p281
        %p548 = pneg %p305
        %p549 = pneg %p302
        %p550 = pneg %p326
        %p551 = pneg %p323
        %p552 = pneg %p347
        %p553 = pneg %p344
        %p554 = pneg %p368
        %p555 = pneg %p365
        %p556 = pneg %p389
        %p557 = pneg %p386
        %p558 = pneg %p410
        %p559 = pneg %p407
        %p560 = pneg %p436
        %p561 = pneg %p433
        %s562 = sand.u32 %s423, 1
        %s563 = scalar_lea.sflag [#allocation3], %s562
        %s564 = sand.u32 %s423, 1
        %s565 = smul.addr %s564, 8
        %s566 = scalar_lea.vmem [#allocation2], %s565
        %p567 = scmp.lt.s32.totalorder %s32, 1
        %s568 = scalar_select %p567, %s32, 1
        %s569 = smul.addr %s568, 8
        %s570 = scalar_lea.vmem %s0, %s569
        %v572 = vld [vmem:[%s570] sm:$0xff]
        %v573 = vld [vmem:[%s1] sm:$0xff]
        %v574 = vld [vmem:[%s2] sm:$0xff]
        %vm575 = vcmask 64512
        %v577 = vsel %vm575, %v574, 0
        %579 = vmatpush.msra.mxu0 0.0
        %580 = vmatpush.msra.mxu0 0.0
        %581 = vmatpush.msra.mxu0 0.0
        %582 = vmatpush.msra.mxu0 0.0
        %583 = vmatpush.msra.mxu0 0.0
        %584 = vmatpush.msra.mxu0 0.0
        %585 = vmatpush.msra.mxu0 0.0
        %586 = vmatpush.msra.mxu0 0.0
        %587 = vmatpush.msra.mxu0 0.0
        %588 = vmatpush.msra.mxu0 0.0
        %589 = vmatpush.msra.mxu0 0.0
        %590 = vmatpush.msra.mxu0 0.0
        %591 = vmatpush.msra.mxu0 0.0
        %592 = vmatpush.msra.mxu0 0.0
        %593 = vmatpush.msra.mxu0 0.0
        %594 = vmatpush.msra.mxu0 %v572
        %595 = vmatmul.f32.gmra.mxu0 %v577
        %v596 = vpop.f32.mrf.mxu0
        %v597 = vadd.f32 0.0, %v596
        %598 = vdwg.mxu0
        %v599 = vld [vmem:[%s3] sm:$0x1]
        %v600 = vmul.f32 %v599, %v599
        %v601 = vsub.f32 %v572, %v597
        %v603 = vperm.slane %v600, 0
        %v605 = vmul.f32 %v603, %v601
        %v606 = vadd.f32 %v597, %v605
        %v607 = vadd.f32 %v606, %v572
        %v608 = vld [vmem:[%s4] sm:$0x1]
        %v609 = vld [vmem:[%s5] sm:$0x1]
        %vm610 = vcmask 261120
        %v611 = vsel %vm610, %v607, 0.0
        %612 = vadd.xlane.f32.xlu0 %v611
        %v613 = vpop.xlane.xlu0 %612
        %v614 = vrcp.pop 32.0
        %v615 = vmul.f32 32.0, %v614
        %v616 = vsub.f32 1.0, %v615
        %v617 = vmul.f32 %v614, %v616
        %v618 = vadd.f32 %v614, %v617
        %vm619 = vweird.f32 %v614
        %v620 = vsel %vm619, %v614, %v618
        %v621 = vmul.f32 %v613, %v620
        %v622 = vsub.f32 %v607, %v621
        %v623 = vmul.f32 %v622, %v622
        %v624 = vsel %vm610, %v623, 0.0
        %625 = vadd.xlane.f32.xlu0 %v624
        %v626 = vpop.xlane.xlu0 %625
        %v627 = vmul.f32 %v626, %v620
        %v628 = vadd.f32 %v627, 1e-12
        %v629 = vrsqrt.pop %v628
        %v630 = vmul.f32 %v629, %v628
        %v631 = vmul.f32 %v630, %v629
        %v632 = vmul.f32 0.5, %v631
        %v633 = vsub.f32 1.5, %v632
        %v634 = vmul.f32 %v629, %v633
        %v635 = vmul.f32 %v628, %v634
        %vm636 = vcmp.eq.f32.partialorder %v628, inf
        %v637 = vsel %vm636, %v628, %v635
        %vm638 = vcmp.eq.f32.partialorder %v628, 0.0
        %v639 = vand.u32 %v628, 2147483648
        %v640 = vsel %vm638, %v639, %v637
        %v641 = vrcp.pop %v640
        %v642 = vmul.f32 %v640, %v641
        %v643 = vsub.f32 1.0, %v642
        %v644 = vmul.f32 %v641, %v643
        %v645 = vadd.f32 %v641, %v644
        %vm646 = vweird.f32 %v640
        %vm647 = vweird.f32 %v641
        %vm648 = vmor %vm646, %vm647
        %v649 = vsel %vm648, %v641, %v645
        %v650 = vand.u32 2147483647, %v640
        %vm651 = vcmp.eq.f32.partialorder %v650, 8.507059e+37
        %v652 = vand.u32 %v640, 2147483648
        %v653 = vor.u32 1.1754944e-38, %v652
        %v654 = vsel %vm651, %v653, %v649
        %v655 = vmul.f32 %v622, %v654
        %v657 = vperm.slane %v608, 0
        %v659 = vmul.f32 %v657, %v655
        %v661 = vperm.slane %v609, 0
        %v663 = vadd.f32 %v659, %v661
        %v664 = vpack.c.bf16 %v572, %v572
        %v665 = vld [vmem:[%s6] sm:$0xf]
        %v666 = vld [vmem:[%s6 + $0x4] sm:$0xf]
        %v667 = vld [vmem:[%s6 + $0x8] sm:$0xf]
        %v668 = vld [vmem:[%s6 + $0xc] sm:$0xf]
        %v669 = vld [vmem:[%s7] sm:$0x1]
        %v671 = vperm.slane %v669, 0
        %v677 = vunpack.c.l.b16 %v665
        %v678 = vunpack.c.l.b16 %v666
        %v679 = vunpack.c.l.b16 %v667
        %v680 = vunpack.c.l.b16 %v668
        %v681 = vpack.c.b16 %v678, %v677
        %v682 = vpack.c.b16 %v680, %v679
        %v686 = vsel %vm610, %v664, 0
        %688 = vmatpush.bf16.msra.mxu0 0
        %689 = vmatpush.bf16.msra.mxu0 0
        %690 = vmatpush.bf16.msra.mxu0 0
        %691 = vmatpush.bf16.msra.mxu0 0
        %692 = vmatpush.bf16.msra.mxu0 0
        %693 = vmatpush.bf16.msra.mxu0 0
        %694 = vmatpush.bf16.msra.mxu0 %v682
        %695 = vmatpush.bf16.msra.mxu0 %v681
        %696 = vmatmul.bf16.gmra.mxu0 %v686
        %v697 = vpop.f32.mrf.mxu0
        %v698 = vadd.f32 %v671, %v697
        %v699 = vpop.f32.mrf.mxu0
        %700 = vdwg.mxu0
        %v701 = vlaneseq
        %v702 = vand.u32 %v701, 127
        %vm703 = vcmp.ge.s32.totalorder %v702, 0
        %vm704 = vcmp.lt.s32.totalorder %v702, 16
        %vm705 = vmand %vm703, %vm704
        %v706 = vsel %vm705, 1, 0
        %v707 = vcvt.s32.f32 %v706
        %v708 = vmul.f32 %v698, %v707
        %710 = vrot.lane.b32.xlu0 %v698, 96
        %v711 = vpop.permute.xlu0 %710
        %v713 = vsel %vm610, %v708, 0
        %v715 = vsel %vm610, %v711, 0
        %717 = vmatpush.xpose.msra.mxu0 0.0
        %718 = vmatpush.xpose.msra.mxu0 0.0
        %719 = vmatpush.xpose.msra.mxu0 0.0
        %720 = vmatpush.xpose.msra.mxu0 0.0
        %721 = vmatpush.xpose.msra.mxu0 0.0
        %722 = vmatpush.xpose.msra.mxu0 0.0
        %723 = vmatpush.xpose.msra.mxu0 0.0
        %724 = vmatpush.xpose.msra.mxu0 0.0
        %725 = vmatpush.xpose.msra.mxu0 0.0
        %726 = vmatpush.xpose.msra.mxu0 0.0
        %727 = vmatpush.xpose.msra.mxu0 0.0
        %728 = vmatpush.xpose.msra.mxu0 0.0
        %729 = vmatpush.xpose.msra.mxu0 0.0
        %730 = vmatpush.xpose.msra.mxu0 0.0
        %731 = vmatpush.xpose.msra.mxu0 0.0
        %732 = vmatpush.xpose.msra.mxu0 %v715
        %733 = vmatmul.f32.gmra.mxu0 %v713
        %v734 = vpop.f32.mrf.mxu0
        %v735 = vadd.f32 0.0, %v734
        %736 = vdwg.mxu0
        %v737 = vmul.f32 %v735, 0.25
        %v738 = vadd.f32 %v737, %v573
        %v739 = vsel %vm575, %v738, -inf
        %740 = vmax.xlane.f32.xlu0 %v739
        %v741 = vpop.xlane.xlu0 %740
        %v742 = vsub.f32 %v738, %v741
        %v743 = vmul.f32 %v742, 1.442695
        %v744 = vpow.pop %v743
        %v745 = vsel %vm575, %v744, 0.0
        %746 = vadd.xlane.f32.xlu0 %v745
        %v747 = vpop.xlane.xlu0 %746
        %v748 = vrcp.pop %v747
        %v749 = vmul.f32 %v747, %v748
        %v750 = vsub.f32 1.0, %v749
        %v751 = vmul.f32 %v748, %v750
        %v752 = vadd.f32 %v748, %v751
        %vm753 = vweird.f32 %v747
        %vm754 = vweird.f32 %v748
        %vm755 = vmor %vm753, %vm754
        %v756 = vsel %vm755, %v748, %v752
        %v757 = vand.u32 2147483647, %v747
        %vm758 = vcmp.eq.f32.partialorder %v757, 8.507059e+37
        %v759 = vand.u32 %v747, 2147483648
        %v760 = vor.u32 1.1754944e-38, %v759
        %v761 = vsel %vm758, %v760, %v756
        %v762 = vmul.f32 %v744, %v761
        %764 = vrot.lane.b32.xlu0 %v707, 64
        %v765 = vpop.permute.xlu0 %764
        %v767 = vmul.f32 %v698, %v765
        %vm768 = vcmp.ge.s32.totalorder %v702, 16
        %vm769 = vcmp.lt.s32.totalorder %v702, 32
        %vm770 = vmand %vm768, %vm769
        %v771 = vsel %vm770, 1, 0
        %v772 = vcvt.s32.f32 %v771
        %v773 = vmul.f32 %v698, %v772
        %v775 = vsel %vm610, %v773, 0
        %777 = vmatpush.xpose.msra.mxu0 0.0
        %778 = vmatpush.xpose.msra.mxu0 0.0
        %779 = vmatpush.xpose.msra.mxu0 0.0
        %780 = vmatpush.xpose.msra.mxu0 0.0
        %781 = vmatpush.xpose.msra.mxu0 0.0
        %782 = vmatpush.xpose.msra.mxu0 0.0
        %783 = vmatpush.xpose.msra.mxu0 0.0
        %784 = vmatpush.xpose.msra.mxu0 0.0
        %785 = vmatpush.xpose.msra.mxu0 0.0
        %786 = vmatpush.xpose.msra.mxu0 0.0
        %787 = vmatpush.xpose.msra.mxu0 0.0
        %788 = vmatpush.xpose.msra.mxu0 0.0
        %789 = vmatpush.xpose.msra.mxu0 0.0
        %790 = vmatpush.xpose.msra.mxu0 0.0
        %791 = vmatpush.xpose.msra.mxu0 0.0
        %792 = vmatpush.xpose.msra.mxu0 %v715
        %793 = vmatmul.f32.gmra.mxu0 %v775
        %v794 = vpop.f32.mrf.mxu0
        %v795 = vadd.f32 0.0, %v794
        %796 = vdwg.mxu0
        %v797 = vmul.f32 %v795, 0.25
        %v798 = vadd.f32 %v797, %v573
        %v799 = vsel %vm575, %v798, -inf
        %800 = vmax.xlane.f32.xlu0 %v799
        %v801 = vpop.xlane.xlu0 %800
        %v802 = vsub.f32 %v798, %v801
        %v803 = vmul.f32 %v802, 1.442695
        %v804 = vpow.pop %v803
        %v805 = vsel %vm575, %v804, 0.0
        %806 = vadd.xlane.f32.xlu0 %v805
        %v807 = vpop.xlane.xlu0 %806
        %v808 = vrcp.pop %v807
        %v809 = vmul.f32 %v807, %v808
        %v810 = vsub.f32 1.0, %v809
        %v811 = vmul.f32 %v808, %v810
        %v812 = vadd.f32 %v808, %v811
        %vm813 = vweird.f32 %v807
        %vm814 = vweird.f32 %v808
        %vm815 = vmor %vm813, %vm814
        %v816 = vsel %vm815, %v808, %v812
        %v817 = vand.u32 2147483647, %v807
        %vm818 = vcmp.eq.f32.partialorder %v817, 8.507059e+37
        %v819 = vand.u32 %v807, 2147483648
        %v820 = vor.u32 1.1754944e-38, %v819
        %v821 = vsel %vm818, %v820, %v816
        %v822 = vmul.f32 %v804, %v821
        %824 = vrot.lane.b32.xlu0 %v772, 64
        %v825 = vpop.permute.xlu0 %824
        %v827 = vmul.f32 %v698, %v825
        %829 = vrot.lane.b32.xlu0 %v827, 64
        %v830 = vpop.permute.xlu0 %829
        %v833 = vsel %vm575, %v822, 0
        %835 = vmatpush.msra.mxu0 0.0
        %836 = vmatpush.msra.mxu0 0.0
        %837 = vmatpush.msra.mxu0 0.0
        %838 = vmatpush.msra.mxu0 0.0
        %839 = vmatpush.msra.mxu0 0.0
        %840 = vmatpush.msra.mxu0 0.0
        %841 = vmatpush.msra.mxu0 0.0
        %842 = vmatpush.msra.mxu0 0.0
        %843 = vmatpush.msra.mxu0 0.0
        %844 = vmatpush.msra.mxu0 0.0
        %845 = vmatpush.msra.mxu0 0.0
        %846 = vmatpush.msra.mxu0 0.0
        %847 = vmatpush.msra.mxu0 0.0
        %848 = vmatpush.msra.mxu0 0.0
        %849 = vmatpush.msra.mxu0 0.0
        %850 = vmatpush.msra.mxu0 %v830
        %851 = vmatmul.f32.gmra.mxu0 %v833
        %v852 = vpop.f32.mrf.mxu0
        %v853 = vadd.f32 0.0, %v852
        %854 = vdwg.mxu0
        %856 = vrot.lane.b32.xlu0 %v767, 64
        %v857 = vpop.permute.xlu0 %856
        %v860 = vsel %vm575, %v762, 0
        %862 = vmatpush.msra.mxu0 0.0
        %863 = vmatpush.msra.mxu0 0.0
        %864 = vmatpush.msra.mxu0 0.0
        %865 = vmatpush.msra.mxu0 0.0
        %866 = vmatpush.msra.mxu0 0.0
        %867 = vmatpush.msra.mxu0 0.0
        %868 = vmatpush.msra.mxu0 0.0
        %869 = vmatpush.msra.mxu0 0.0
        %870 = vmatpush.msra.mxu0 0.0
        %871 = vmatpush.msra.mxu0 0.0
        %872 = vmatpush.msra.mxu0 0.0
        %873 = vmatpush.msra.mxu0 0.0
        %874 = vmatpush.msra.mxu0 0.0
        %875 = vmatpush.msra.mxu0 0.0
        %876 = vmatpush.msra.mxu0 0.0
        %877 = vmatpush.msra.mxu0 %v857
        %878 = vmatmul.f32.gmra.mxu0 %v860
        %v879 = vpop.f32.mrf.mxu0
        %v880 = vadd.f32 %v853, %v879
        %881 = vdwg.mxu0
        %v882 = vpack.c.bf16 %v880, %v880
        %v883 = vld [vmem:[%s8] sm:$0xf]
        %v884 = vld [vmem:[%s8 + $0x4] sm:$0xf]
        %v885 = vld [vmem:[%s8 + $0x8] sm:$0xf]
        %v886 = vld [vmem:[%s8 + $0xc] sm:$0xf]
        %v887 = vld [vmem:[%s9] sm:$0x1]
        %v889 = vperm.slane %v887, 0
        %v895 = vunpack.c.l.b16 %v883
        %v896 = vunpack.c.l.b16 %v884
        %v897 = vunpack.c.l.b16 %v885
        %v898 = vunpack.c.l.b16 %v886
        %v899 = vpack.c.b16 %v896, %v895
        %v900 = vpack.c.b16 %v898, %v897
        %v904 = vsel %vm610, %v882, 0
        %906 = vmatpush.bf16.msra.mxu0 0
        %907 = vmatpush.bf16.msra.mxu0 0
        %908 = vmatpush.bf16.msra.mxu0 0
        %909 = vmatpush.bf16.msra.mxu0 0
        %910 = vmatpush.bf16.msra.mxu0 0
        %911 = vmatpush.bf16.msra.mxu0 0
        %912 = vmatpush.bf16.msra.mxu0 %v900
        %913 = vmatpush.bf16.msra.mxu0 %v899
        %914 = vmatmul.bf16.gmra.mxu0 %v904
        %v915 = vpop.f32.mrf.mxu0
        %v916 = vadd.f32 %v889, %v915
        %v917 = vpop.f32.mrf.mxu0
        %918 = vdwg.mxu0
        %v919 = vadd.f32 %v916, %v572
        %v920 = vld [vmem:[%s10] sm:$0x1]
        %v921 = vld [vmem:[%s11] sm:$0x1]
        %v922 = vsel %vm610, %v919, 0.0
        %923 = vadd.xlane.f32.xlu0 %v922
        %v924 = vpop.xlane.xlu0 %923
        %v925 = vmul.f32 %v924, %v620
        %v926 = vsub.f32 %v919, %v925
        %v927 = vmul.f32 %v926, %v926
        %v928 = vsel %vm610, %v927, 0.0
        %929 = vadd.xlane.f32.xlu0 %v928
        %v930 = vpop.xlane.xlu0 %929
        %v931 = vmul.f32 %v930, %v620
        %v932 = vadd.f32 %v931, 1e-12
        %v933 = vrsqrt.pop %v932
        %v934 = vmul.f32 %v933, %v932
        %v935 = vmul.f32 %v934, %v933
        %v936 = vmul.f32 0.5, %v935
        %v937 = vsub.f32 1.5, %v936
        %v938 = vmul.f32 %v933, %v937
        %v939 = vmul.f32 %v932, %v938
        %vm940 = vcmp.eq.f32.partialorder %v932, inf
        %v941 = vsel %vm940, %v932, %v939
        %vm942 = vcmp.eq.f32.partialorder %v932, 0.0
        %v943 = vand.u32 %v932, 2147483648
        %v944 = vsel %vm942, %v943, %v941
        %v945 = vrcp.pop %v944
        %v946 = vmul.f32 %v944, %v945
        %v947 = vsub.f32 1.0, %v946
        %v948 = vmul.f32 %v945, %v947
        %v949 = vadd.f32 %v945, %v948
        %vm950 = vweird.f32 %v944
        %vm951 = vweird.f32 %v945
        %vm952 = vmor %vm950, %vm951
        %v953 = vsel %vm952, %v945, %v949
        %v954 = vand.u32 2147483647, %v944
        %vm955 = vcmp.eq.f32.partialorder %v954, 8.507059e+37
        %v956 = vand.u32 %v944, 2147483648
        %v957 = vor.u32 1.1754944e-38, %v956
        %v958 = vsel %vm955, %v957, %v953
        %v959 = vmul.f32 %v926, %v958
        %v961 = vperm.slane %v920, 0
        %v963 = vmul.f32 %v961, %v959
        %v965 = vperm.slane %v921, 0
        %v967 = vadd.f32 %v963, %v965
        %v968 = vmul.f32 %v663, 0.7
        %v969 = vmul.f32 %v967, 0.3
        %v970 = vadd.f32 %v968, %v969
        %v971 = vpack.c.bf16 %v970, %v970
        %v972 = vld [vmem:[%s12] sm:$0xf]
        %v973 = vld [vmem:[%s12 + $0x4] sm:$0xf]
        %v974 = vld [vmem:[%s12 + $0x8] sm:$0xf]
        %v975 = vld [vmem:[%s12 + $0xc] sm:$0xf]
        %v976 = vld [vmem:[%s13] sm:$0x1]
        %v978 = vperm.slane %v976, 0
        %v984 = vunpack.c.l.b16 %v972
        %v985 = vunpack.c.l.b16 %v973
        %v986 = vunpack.c.l.b16 %v974
        %v987 = vunpack.c.l.b16 %v975
        %v988 = vpack.c.b16 %v985, %v984
        %v989 = vpack.c.b16 %v987, %v986
        %v993 = vsel %vm610, %v971, 0
        %995 = vmatpush.bf16.msra.mxu0 0
        %996 = vmatpush.bf16.msra.mxu0 0
        %997 = vmatpush.bf16.msra.mxu0 0
        %998 = vmatpush.bf16.msra.mxu0 0
        %999 = vmatpush.bf16.msra.mxu0 0
        %1000 = vmatpush.bf16.msra.mxu0 0
        %1001 = vmatpush.bf16.msra.mxu0 %v989
        %1002 = vmatpush.bf16.msra.mxu0 %v988
        %1003 = vmatmul.bf16.gmra.mxu0 %v993
        %v1004 = vpop.f32.mrf.mxu0
        %v1005 = vadd.f32 %v978, %v1004
        %v1006 = vpop.f32.mrf.mxu0
        %1007 = vdwg.mxu0
        %v1008 = vmul.f32 %v1005, 0.5
        %v1009 = vrcp.pop 1.4142135
        %v1010 = vmul.f32 1.4142135, %v1009
        %v1011 = vsub.f32 1.0, %v1010
        %v1012 = vmul.f32 %v1009, %v1011
        %v1013 = vadd.f32 %v1009, %v1012
        %vm1014 = vweird.f32 %v1009
        %v1015 = vsel %vm1014, %v1009, %v1013
        %v1016 = vmul.f32 %v1005, %v1015
        %v1017 = vmul.f32 %v1016, %v1016
        %v1018 = vmin.f32 16.0, %v1017
        %v1019 = vmul.f32 %v1018, 2.1237322e-06
        %v1020 = vadd.f32 %v1019, 0.00028619796
        %v1021 = vmul.f32 %v1018, %v1020
        %v1022 = vadd.f32 %v1021, 0.0036580483
        %v1023 = vmul.f32 %v1018, %v1022
        %v1024 = vadd.f32 %v1023, 0.05243302
        %v1025 = vmul.f32 %v1018, %v1024
        %v1026 = vadd.f32 %v1025, 0.18741608
        %v1027 = vmul.f32 %v1018, %v1026
        %v1028 = vadd.f32 %v1027, 1.1283791
        %v1029 = vmul.f32 %v1016, %v1028
        %v1030 = vmul.f32 %v1018, 3.8918573e-05
        %v1031 = vadd.f32 %v1030, 0.001143296
        %v1032 = vmul.f32 %v1018, %v1031
        %v1033 = vadd.f32 %v1032, 0.014752088
        %v1034 = vmul.f32 %v1018, %v1033
        %v1035 = vadd.f32 %v1034, 0.112945676
        %v1036 = vmul.f32 %v1018, %v1035
        %v1037 = vadd.f32 %v1036, 0.4994258
        %v1038 = vmul.f32 %v1018, %v1037
        %v1039 = vadd.f32 %v1038, 1.0
        %v1040 = vrcp.pop %v1039
        %v1041 = vmul.f32 %v1039, %v1040
        %v1042 = vsub.f32 1.0, %v1041
        %v1043 = vmul.f32 %v1040, %v1042
        %v1044 = vadd.f32 %v1040, %v1043
        %vm1045 = vweird.f32 %v1039
        %vm1046 = vweird.f32 %v1040
        %vm1047 = vmor %vm1045, %vm1046
        %v1048 = vsel %vm1047, %v1040, %v1044
        %v1049 = vand.u32 2147483647, %v1039
        %vm1050 = vcmp.eq.f32.partialorder %v1049, 8.507059e+37
        %v1051 = vand.u32 %v1039, 2147483648
        %v1052 = vor.u32 1.1754944e-38, %v1051
        %v1053 = vsel %vm1050, %v1052, %v1048
        %v1054 = vmul.f32 %v1029, %v1053
        %v1055 = vmin.f32 %v1054, 1.0
        %v1056 = vmax.f32 %v1055, -1.0
        %v1057 = vadd.f32 %v1056, 1.0
        %v1058 = vmul.f32 %v1008, %v1057
        %v1059 = vpack.c.bf16 %v1058, %v1058
        %v1060 = vld [vmem:[%s14] sm:$0xf]
        %v1061 = vld [vmem:[%s14 + $0x4] sm:$0xf]
        %v1062 = vld [vmem:[%s14 + $0x8] sm:$0xf]
        %v1063 = vld [vmem:[%s14 + $0xc] sm:$0xf]
        %v1064 = vld [vmem:[%s14 + $0x10] sm:$0xf]
        %v1065 = vld [vmem:[%s14 + $0x14] sm:$0xf]
        %v1066 = vld [vmem:[%s14 + $0x18] sm:$0xf]
        %v1067 = vld [vmem:[%s14 + $0x1c] sm:$0xf]
        %v1068 = vld [vmem:[%s14 + $0x20] sm:$0xf]
        %v1069 = vld [vmem:[%s14 + $0x24] sm:$0xf]
        %v1070 = vld [vmem:[%s14 + $0x28] sm:$0xf]
        %v1071 = vld [vmem:[%s14 + $0x2c] sm:$0xf]
        %v1072 = vld [vmem:[%s14 + $0x30] sm:$0xf]
        %v1073 = vld [vmem:[%s14 + $0x34] sm:$0xf]
        %v1074 = vld [vmem:[%s14 + $0x38] sm:$0xf]
        %v1075 = vld [vmem:[%s14 + $0x3c] sm:$0xf]
        %v1076 = vld [vmem:[%s15] sm:$0x1]
        %v1078 = vperm.slane %v1076, 0
        %v1096 = vunpack.c.l.b16 %v1060
        %v1097 = vunpack.c.l.b16 %v1061
        %v1098 = vunpack.c.l.b16 %v1062
        %v1099 = vunpack.c.l.b16 %v1063
        %v1100 = vunpack.c.l.b16 %v1064
        %v1101 = vunpack.c.l.b16 %v1065
        %v1102 = vunpack.c.l.b16 %v1066
        %v1103 = vunpack.c.l.b16 %v1067
        %v1104 = vunpack.c.l.b16 %v1068
        %v1105 = vunpack.c.l.b16 %v1069
        %v1106 = vunpack.c.l.b16 %v1070
        %v1107 = vunpack.c.l.b16 %v1071
        %v1108 = vunpack.c.l.b16 %v1072
        %v1109 = vunpack.c.l.b16 %v1073
        %v1110 = vunpack.c.l.b16 %v1074
        %v1111 = vunpack.c.l.b16 %v1075
        %v1112 = vpack.c.b16 %v1097, %v1096
        %v1113 = vpack.c.b16 %v1099, %v1098
        %v1114 = vpack.c.b16 %v1101, %v1100
        %v1115 = vpack.c.b16 %v1103, %v1102
        %v1116 = vpack.c.b16 %v1105, %v1104
        %v1117 = vpack.c.b16 %v1107, %v1106
        %v1118 = vpack.c.b16 %v1109, %v1108
        %v1119 = vpack.c.b16 %v1111, %v1110
        %1128 = vmatpush.bf16.msra.mxu0 %v1119
        %1129 = vmatpush.bf16.msra.mxu0 %v1118
        %1130 = vmatpush.bf16.msra.mxu0 %v1117
        %1131 = vmatpush.bf16.msra.mxu0 %v1116
        %1132 = vmatpush.bf16.msra.mxu0 %v1115
        %1133 = vmatpush.bf16.msra.mxu0 %v1114
        %1134 = vmatpush.bf16.msra.mxu0 %v1113
        %1135 = vmatpush.bf16.msra.mxu0 %v1112
        %1136 = vmatmul.bf16.gmra.mxu0 %v1059
        %v1137 = vpop.f32.mrf.mxu0
        %v1138 = vadd.f32 %v1078, %v1137
        %v1139 = vpop.f32.mrf.mxu0
        %1140 = vdwg.mxu0
        %v1141 = vadd.f32 %v1138, %v970
        %v1142 = vld [vmem:[%s16] sm:$0x1]
        %v1143 = vld [vmem:[%s17] sm:$0x1]
        %v1144 = vsel %vm610, %v1141, 0.0
        %1145 = vadd.xlane.f32.xlu0 %v1144
        %v1146 = vpop.xlane.xlu0 %1145
        %v1147 = vmul.f32 %v1146, %v620
        %v1148 = vsub.f32 %v1141, %v1147
        %v1149 = vmul.f32 %v1148, %v1148
        %v1150 = vsel %vm610, %v1149, 0.0
        %1151 = vadd.xlane.f32.xlu0 %v1150
        %v1152 = vpop.xlane.xlu0 %1151
        %v1153 = vmul.f32 %v1152, %v620
        %v1154 = vadd.f32 %v1153, 1e-12
        %v1155 = vrsqrt.pop %v1154
        %v1156 = vmul.f32 %v1155, %v1154
        %v1157 = vmul.f32 %v1156, %v1155
        %v1158 = vmul.f32 0.5, %v1157
        %v1159 = vsub.f32 1.5, %v1158
        %v1160 = vmul.f32 %v1155, %v1159
        %v1161 = vmul.f32 %v1154, %v1160
        %vm1162 = vcmp.eq.f32.partialorder %v1154, inf
        %v1163 = vsel %vm1162, %v1154, %v1161
        %vm1164 = vcmp.eq.f32.partialorder %v1154, 0.0
        %v1165 = vand.u32 %v1154, 2147483648
        %v1166 = vsel %vm1164, %v1165, %v1163
        %v1167 = vrcp.pop %v1166
        %v1168 = vmul.f32 %v1166, %v1167
        %v1169 = vsub.f32 1.0, %v1168
        %v1170 = vmul.f32 %v1167, %v1169
        %v1171 = vadd.f32 %v1167, %v1170
        %vm1172 = vweird.f32 %v1166
        %vm1173 = vweird.f32 %v1167
        %vm1174 = vmor %vm1172, %vm1173
        %v1175 = vsel %vm1174, %v1167, %v1171
        %v1176 = vand.u32 2147483647, %v1166
        %vm1177 = vcmp.eq.f32.partialorder %v1176, 8.507059e+37
        %v1178 = vand.u32 %v1166, 2147483648
        %v1179 = vor.u32 1.1754944e-38, %v1178
        %v1180 = vsel %vm1177, %v1179, %v1175
        %v1181 = vmul.f32 %v1148, %v1180
        %v1183 = vperm.slane %v1142, 0
        %v1185 = vmul.f32 %v1183, %v1181
        %v1187 = vperm.slane %v1143, 0
        %v1189 = vadd.f32 %v1185, %v1187
        %1190 = vst.msk [vmem:[%s566] sm:$0xff] %vm610, %v1189
        %s1191 = sand.u32 %s423, 1
        %s1192 = scalar_lea.sflag [#allocation3], %s1191
        %s1193 = sand.u32 %s423, 1
        %s1194 = smul.addr %s1193, 8
        %s1195 = scalar_lea.vmem [#allocation2], %s1194
        // Predicated region
        $region93: #{bsarec_block.1} parent=91 // pred_check
          %p1196 = pneg %p433
        $region94: #{bsarec_block.1} parent=91 // pred_check_branch
          %1198 = sbr.rel (%p1196) target = $region96
        $region95: #{bsarec_block.1} parent=91 // pred_region
          %1200 = vsyncadd %s1192, 0
          %s1201 = smul.addr %s32, 8
          %s1202 = scalar_lea.hbm %s18, %s1201
          %s1204 = sshll.u32 %s1195, 4
          %s1205 = int_to_ptr.vmem [resolvable:$true] %s1204
          %s1206 = sshll.u32 %s1202, 4
          %s1207 = int_to_ptr.hbm [resolvable:$true] %s1206
          %1209 = dma.vmem_to_hbm [thread:$0]  %s1205, 128, %s1207, %s1192
        $region96: #{bsarec_block.1} parent=91 // pred_fallthru
          _
      $region92: #{bsarec_block.1} parent=5 // pred_fallthru
        _
      %p1210 = scmp.le.s32.totalorder 2, %s27
      // Predicated region
      $region97: #{bsarec_block.1} parent=5 // pred_check
        %p1211 = pneg %p1210
      $region98: #{bsarec_block.1} parent=5 // pred_check_branch
        %1213 = sbr.rel (%p1211) target = $region100
      $region99: #{bsarec_block.1} parent=5 // pred_region
        %s1214 = ssub.s32 %s27, 2
        // Predicated region
        $region101: #{bsarec_block.1} parent=99 // pred_check
          %p1215 = pneg %p439
        $region102: #{bsarec_block.1} parent=99 // pred_check_branch
          %1217 = sbr.rel (%p1215) target = $region104
        $region103: #{bsarec_block.1} parent=99 // pred_region
          %s1218 = sand.u32 %s424, 1
          %s1219 = scalar_lea.sflag [#allocation3], %s1218
          %s1220 = sand.u32 %s424, 1
          %s1221 = smul.addr %s1220, 8
          %s1222 = scalar_lea.vmem [#allocation2], %s1221
          %1224 = dma.done %s1219, 128
        $region104: #{bsarec_block.1} parent=99 // pred_fallthru
          _
      $region100: #{bsarec_block.1} parent=5 // pred_fallthru
        _
    $region6: #{bsarec_block.1} parent=1 // loop_footer
      %s31 = sadd.s32 1, %s27
    $region7: #{bsarec_block.1} parent=1 // loop_footer_branch
      %26 = sbr.rel target = $region3
    $region8: #{bsarec_block.1} parent=1 // loop_exit
      _
    %1225 = vsyncpa [#allocation3], 1
    %s1226 = scalar_lea.sflag [#allocation3], 1
    %1227 = vsyncpa %s1226, 1

</llo_original>
